<compile_context>
chip_gen: v7x
topology: tpu7x:2x2x1
jax: 0.10.0
libtpu: 0.0.40
codegen_flags: <defaults>
</compile_context>

<pallas_src>
import functools

import jax
import jax.numpy as jnp
from jax import lax
from jax.experimental import pallas as pl
from jax.experimental.pallas import tpu as pltpu


def _cdiv(a, b):
    return (a + b - 1) // b


def _ncc_kernel(i_ref, j_ref, out_ref, *, win, eps, tb, h, w):
    g = pl.program_id(1)

    # Zero the resident output accumulator block at the start of the reduction.
    @pl.when(g == 0)
    def _():
        out_ref[...] = jnp.zeros_like(out_ref)

    # Banded window-sum matrices, generated in-kernel (cheap VPU work, no DMA).
    # Window offsets relative to the center: [lo, hi] (odd win -> symmetric).
    half = win // 2
    lo = -half
    hi = win - half - 1
    ri = lax.broadcasted_iota(jnp.int32, (h, h), 0)
    rj = lax.broadcasted_iota(jnp.int32, (h, h), 1)
    dr = rj - ri
    Sr = ((dr >= lo) & (dr <= hi)).astype(jnp.float32)           # (H, H) row sums
    ci = lax.broadcasted_iota(jnp.int32, (w, w), 0)
    cj = lax.broadcasted_iota(jnp.int32, (w, w), 1)
    dc = ci - cj
    Sc = ((dc >= lo) & (dc <= hi)).astype(jnp.float32)           # (W, W) col sums

    # NOTE: original torch code uses win**3 (copied from the 3D variant); keep it.
    inv_ws = jnp.float32(1.0 / (float(win) ** 3))
    eps_f = jnp.float32(eps)

    def body(t, partial):
        Ii = i_ref[t].astype(jnp.float32)                        # (H, W)
        Jj = j_ref[t].astype(jnp.float32)

        # Fused box-sums: one Sr @ (H, 5W) matmul, restack, one (5H, W) @ Sc matmul.
        M1 = jnp.concatenate([Ii, Jj, Ii * Ii, Jj * Jj, Ii * Jj], axis=1)   # (H, 5W)
        T = jnp.dot(Sr, M1, preferred_element_type=jnp.float32)             # (H, 5W)
        V = jnp.concatenate([T[:, k * w:(k + 1) * w] for k in range(5)],
                            axis=0)                                          # (5H, W)
        Y = jnp.dot(V, Sc, preferred_element_type=jnp.float32)              # (5H, W)

        I_sum = Y[0 * h:1 * h, :]
        J_sum = Y[1 * h:2 * h, :]
        I2_sum = Y[2 * h:3 * h, :]
        J2_sum = Y[3 * h:4 * h, :]
        IJ_sum = Y[4 * h:5 * h, :]

        # Algebraically simplified NCC (identical to the expanded torch formula):
        cross = IJ_sum - I_sum * J_sum * inv_ws
        I_var = I2_sum - I_sum * I_sum * inv_ws
        J_var = J2_sum - J_sum * J_sum * inv_ws
        cc = cross * cross / (I_var * J_var + eps_f)
        return partial + cc

    partial = lax.fori_loop(0, tb, body, jnp.zeros((h, w), jnp.float32),
                            unroll=True)
    out_ref[0] = out_ref[0] + partial


def ncc_loss(I, J, win=21, eps=1e-5):
    """Pallas NCC loss. I, J: (N, C, H, W). Returns float32 scalar."""
    N, C, H, W = I.shape
    B = N * C
    If = I.reshape(B, H, W)          # keep original dtype; cast inside kernel
    Jf = J.reshape(B, H, W)
    esize = jnp.dtype(If.dtype).itemsize

    # Shard the batch reduction across 2 TensorCores (v7x); harmless on 1-TC chips.
    NSPLIT = 2
    per_core = _cdiv(B, NSPLIT)

    # Images per grid step: amortize per-step overhead, bounded by a VMEM budget
    # for the double-buffered I/J input blocks (and by unrolled-code-size sanity).
    vmem_budget = 8 * 1024 * 1024
    tb_cap = max(1, vmem_budget // (2 * 2 * H * W * esize))
    TB = int(min(per_core, 16, tb_cap))
    steps = _cdiv(per_core, TB)
    B_pad = NSPLIT * steps * TB
    if B_pad != B:
        pad = B_pad - B
        # Zero-padded images contribute exactly 0 to the cc sum (cross == 0).
        If = jnp.pad(If, ((0, pad), (0, 0), (0, 0)))
        Jf = jnp.pad(Jf, ((0, pad), (0, 0), (0, 0)))

    kernel = functools.partial(_ncc_kernel, win=win, eps=eps, tb=TB, h=H, w=W)

    # Inputs (double-buffered) + output block + Sr/Sc/temporaries headroom.
    vmem_limit = int(min(64 * 1024 * 1024,
                         max(32 * 1024 * 1024,
                             4 * (2 * 2 * TB * H * W * esize)
                             + 16 * H * W * 4 + 4 * (H * H + W * W) * 4)))

    io_map = lambda p, g: (p * steps + g, 0, 0)

    partials = pl.pallas_call(
        kernel,
        out_shape=jax.ShapeDtypeStruct((NSPLIT, H, W), jnp.float32),
        grid_spec=pltpu.PrefetchScalarGridSpec(
            num_scalar_prefetch=0,
            grid=(NSPLIT, steps),
            in_specs=[
                pl.BlockSpec((TB, H, W), io_map),
                pl.BlockSpec((TB, H, W), io_map),
            ],
            out_specs=pl.BlockSpec((1, H, W), lambda p, g: (p, 0, 0)),
        ),
        compiler_params=pltpu.CompilerParams(
            dimension_semantics=("parallel", "arbitrary"),
            vmem_limit_bytes=vmem_limit),
    )(If, Jf)

    total = jnp.float32(B * H * W)
    return (1.0 - jnp.sum(partials) / total).astype(jnp.float32)


def _ncc_reference(I, J, win=21, eps=1e-5):
    """Pure-JAX reference mirroring the torch cumsum implementation (f32)."""
    I = I.astype(jnp.float32)
    J = J.astype(jnp.float32)
    half = win // 2

    def wsum(x):
        xp = jnp.pad(x, ((0, 0), (0, 0), (half + 1, half), (half + 1, half)))
        cs = jnp.cumsum(jnp.cumsum(xp, axis=2), axis=3)
        H, W = x.shape[2:]
        return (cs[:, :, win:, win:] - cs[:, :, win:, :W]
                - cs[:, :, :H, win:] + cs[:, :, :H, :W])

    I2, J2, IJ = I * I, J * J, I * J
    I_sum, J_sum = wsum(I), wsum(J)
    I2_sum, J2_sum, IJ_sum = wsum(I2), wsum(J2), wsum(IJ)
    ws = float(win) ** 3
    u_I, u_J = I_sum / ws, J_sum / ws
    cross = IJ_sum - u_J * I_sum - u_I * J_sum + u_I * u_J * ws
    I_var = I2_sum - 2 * u_I * I_sum + u_I * u_I * ws
    J_var = J2_sum - 2 * u_J * J_sum + u_J * u_J * ws
    cc = cross * cross / (I_var * J_var + eps)
    return (1.0 - jnp.mean(cc)).astype(jnp.float32)


if __name__ == "__main__":
    key = jax.random.PRNGKey(0)
    k1, k2 = jax.random.split(key)
    N, C, H, W = 2, 4, 16, 16
    I = jax.random.normal(k1, (N, C, H, W), dtype=jnp.float32)
    J = jax.random.normal(k2, (N, C, H, W), dtype=jnp.float32)

    loss = jax.jit(ncc_loss)(I, J)
    loss = jax.block_until_ready(loss)

    ref = _ncc_reference(I, J)
    assert jnp.allclose(loss, ref, atol=1e-3, rtol=1e-3), (loss, ref)

    print("KERNEL_OK")
</pallas_src>

<mosaic_0001>
module attributes {stable_mosaic.version = 11 : i64} {
  func.func @_ncc_kernel(%arg0: i32, %arg1: i32, %arg2: memref<4x16x16xf32, #tpu.memory_space<vmem>>, %arg3: memref<4x16x16xf32, #tpu.memory_space<vmem>>, %arg4: memref<1x16x16xf32, #tpu.memory_space<vmem>>) attributes {dimension_semantics = [#tpu.dimension_semantics<parallel>, #tpu.dimension_semantics<arbitrary>], iteration_bounds = array<i64: 2, 1>, scalar_prefetch = 0 : i64, scratch_operands = 0 : i64, tpu.core_type = #tpu.core_type<tc>, window_params = [{transform_indices = @transform_0, window_bounds = array<i64: 4, 16, 16>}, {transform_indices = @transform_1, window_bounds = array<i64: 4, 16, 16>}, {transform_indices = @transform_2, window_bounds = array<i64: 1, 16, 16>}]} {
    %c0_i32 = arith.constant 0 : i32
    %0 = arith.cmpi eq, %arg1, %c0_i32 : i32
    %1 = arith.extui %0 : i1 to i32
    %c0_i32_0 = arith.constant 0 : i32
    %2 = arith.cmpi ne, %1, %c0_i32_0 : i32
    scf.if %2 {
      %cst_35 = arith.constant 0.000000e+00 : f32
      %194 = vector.broadcast %cst_35 : f32 to vector<1x16x16xf32>
      %c0_36 = arith.constant 0 : index
      %c0_37 = arith.constant 0 : index
      %c0_38 = arith.constant 0 : index
      %195 = vector.load %arg4[%c0_36, %c0_37, %c0_38] : memref<1x16x16xf32, #tpu.memory_space<vmem>>, vector<1x16x16xf32>
      tpu.vector_store %arg4[%c0_36, %c0_37, %c0_38], %194 {strides = array<i32>} : memref<1x16x16xf32, #tpu.memory_space<vmem>>, vector<1x16x16xf32>,
    } else {
    }
    %3 = tpu.iota {dimensions = array<i32: 0>} : vector<16x16xi32>
    %4 = tpu.iota {dimensions = array<i32: 1>} : vector<16x16xi32>
    %5 = arith.subi %4, %3 : vector<16x16xi32>
    %c-10_i32 = arith.constant -10 : i32
    %6 = vector.broadcast %c-10_i32 : i32 to vector<16x16xi32>
    %7 = arith.cmpi sge, %5, %6 : vector<16x16xi32>
    %c10_i32 = arith.constant 10 : i32
    %8 = vector.broadcast %c10_i32 : i32 to vector<16x16xi32>
    %9 = arith.cmpi sle, %5, %8 : vector<16x16xi32>
    %10 = arith.andi %7, %9 : vector<16x16xi1>
    %11 = arith.extui %10 : vector<16x16xi1> to vector<16x16xi32>
    %12 = arith.sitofp %11 : vector<16x16xi32> to vector<16x16xf32>
    %13 = tpu.iota {dimensions = array<i32: 0>} : vector<16x16xi32>
    %14 = tpu.iota {dimensions = array<i32: 1>} : vector<16x16xi32>
    %15 = arith.subi %13, %14 : vector<16x16xi32>
    %c-10_i32_1 = arith.constant -10 : i32
    %16 = vector.broadcast %c-10_i32_1 : i32 to vector<16x16xi32>
    %17 = arith.cmpi sge, %15, %16 : vector<16x16xi32>
    %c10_i32_2 = arith.constant 10 : i32
    %18 = vector.broadcast %c10_i32_2 : i32 to vector<16x16xi32>
    %19 = arith.cmpi sle, %15, %18 : vector<16x16xi32>
    %20 = arith.andi %17, %19 : vector<16x16xi1>
    %21 = arith.extui %20 : vector<16x16xi1> to vector<16x16xi32>
    %22 = arith.sitofp %21 : vector<16x16xi32> to vector<16x16xf32>
    %cst = arith.constant 0.000000e+00 : f32
    %23 = vector.broadcast %cst : f32 to vector<16x16xf32>
    %cst_3 = arith.constant 1.079797E-4 : f32
    %cst_4 = arith.constant 9.99999974E-6 : f32
    %c0_i32_5 = arith.constant 0 : i32
    %24 = arith.index_cast %c0_i32_5 : i32 to index
    %c0 = arith.constant 0 : index
    %c0_6 = arith.constant 0 : index
    %25 = vector.load %arg2[%24, %c0, %c0_6] : memref<4x16x16xf32, #tpu.memory_space<vmem>>, vector<1x16x16xf32>
    %26 = vector.shape_cast %25 : vector<1x16x16xf32> to vector<16x16xf32>
    %27 = arith.index_cast %c0_i32_5 : i32 to index
    %c0_7 = arith.constant 0 : index
    %c0_8 = arith.constant 0 : index
    %28 = vector.load %arg3[%27, %c0_7, %c0_8] : memref<4x16x16xf32, #tpu.memory_space<vmem>>, vector<1x16x16xf32>
    %29 = vector.shape_cast %28 : vector<1x16x16xf32> to vector<16x16xf32>
    %30 = arith.mulf %26, %26 : vector<16x16xf32>
    %31 = arith.mulf %29, %29 : vector<16x16xf32>
    %32 = arith.mulf %26, %29 : vector<16x16xf32>
    %33 = tpu.concatenate %26, %29, %30, %31, %32 in 1 : vector<16x16xf32>, vector<16x16xf32>, vector<16x16xf32>, vector<16x16xf32>, vector<16x16xf32> -> vector<16x80xf32>
    %cst_9 = arith.constant dense<0.000000e+00> : vector<16x80xf32>
    %34 = tpu.matmul %12, %33, %cst_9 {dimension_numbers = #tpu.dot_dimension_numbers<[1], [0], [0], [1], [0, 0, 1, 1], [], []>} : vector<16x16xf32>, vector<16x80xf32>, vector<16x80xf32> -> vector<16x80xf32>
    %35 = vector.extract_strided_slice %34 {offsets = [0, 0], sizes = [16, 16], strides = [1, 1]} : vector<16x80xf32> to vector<16x16xf32>
    %36 = vector.extract_strided_slice %34 {offsets = [0, 16], sizes = [16, 16], strides = [1, 1]} : vector<16x80xf32> to vector<16x16xf32>
    %37 = vector.extract_strided_slice %34 {offsets = [0, 32], sizes = [16, 16], strides = [1, 1]} : vector<16x80xf32> to vector<16x16xf32>
    %38 = vector.extract_strided_slice %34 {offsets = [0, 48], sizes = [16, 16], strides = [1, 1]} : vector<16x80xf32> to vector<16x16xf32>
    %39 = vector.extract_strided_slice %34 {offsets = [0, 64], sizes = [16, 16], strides = [1, 1]} : vector<16x80xf32> to vector<16x16xf32>
    %40 = tpu.concatenate %35, %36, %37, %38, %39 in 0 : vector<16x16xf32>, vector<16x16xf32>, vector<16x16xf32>, vector<16x16xf32>, vector<16x16xf32> -> vector<80x16xf32>
    %cst_10 = arith.constant dense<0.000000e+00> : vector<80x16xf32>
    %41 = tpu.matmul %40, %22, %cst_10 {dimension_numbers = #tpu.dot_dimension_numbers<[1], [0], [0], [1], [0, 0, 1, 1], [], []>} : vector<80x16xf32>, vector<16x16xf32>, vector<80x16xf32> -> vector<80x16xf32>
    %42 = vector.extract_strided_slice %41 {offsets = [0, 0], sizes = [16, 16], strides = [1, 1]} : vector<80x16xf32> to vector<16x16xf32>
    %43 = vector.extract_strided_slice %41 {offsets = [16, 0], sizes = [16, 16], strides = [1, 1]} : vector<80x16xf32> to vector<16x16xf32>
    %44 = vector.extract_strided_slice %41 {offsets = [32, 0], sizes = [16, 16], strides = [1, 1]} : vector<80x16xf32> to vector<16x16xf32>
    %45 = vector.extract_strided_slice %41 {offsets = [48, 0], sizes = [16, 16], strides = [1, 1]} : vector<80x16xf32> to vector<16x16xf32>
    %46 = vector.extract_strided_slice %41 {offsets = [64, 0], sizes = [16, 16], strides = [1, 1]} : vector<80x16xf32> to vector<16x16xf32>
    %47 = arith.mulf %42, %43 : vector<16x16xf32>
    %48 = vector.broadcast %cst_3 : f32 to vector<16x16xf32>
    %49 = arith.mulf %47, %48 : vector<16x16xf32>
    %50 = arith.subf %46, %49 : vector<16x16xf32>
    %51 = arith.mulf %42, %42 : vector<16x16xf32>
    %52 = vector.broadcast %cst_3 : f32 to vector<16x16xf32>
    %53 = arith.mulf %51, %52 : vector<16x16xf32>
    %54 = arith.subf %44, %53 : vector<16x16xf32>
    %55 = arith.mulf %43, %43 : vector<16x16xf32>
    %56 = vector.broadcast %cst_3 : f32 to vector<16x16xf32>
    %57 = arith.mulf %55, %56 : vector<16x16xf32>
    %58 = arith.subf %45, %57 : vector<16x16xf32>
    %59 = arith.mulf %50, %50 : vector<16x16xf32>
    %60 = arith.mulf %54, %58 : vector<16x16xf32>
    %61 = vector.broadcast %cst_4 : f32 to vector<16x16xf32>
    %62 = arith.addf %60, %61 : vector<16x16xf32>
    %63 = arith.divf %59, %62 : vector<16x16xf32>
    %64 = arith.addf %23, %63 : vector<16x16xf32>
    %c1_i32 = arith.constant 1 : i32
    %65 = arith.index_cast %c1_i32 : i32 to index
    %c0_11 = arith.constant 0 : index
    %c0_12 = arith.constant 0 : index
    %66 = vector.load %arg2[%65, %c0_11, %c0_12] : memref<4x16x16xf32, #tpu.memory_space<vmem>>, vector<1x16x16xf32>
    %67 = vector.shape_cast %66 : vector<1x16x16xf32> to vector<16x16xf32>
    %68 = arith.index_cast %c1_i32 : i32 to index
    %c0_13 = arith.constant 0 : index
    %c0_14 = arith.constant 0 : index
    %69 = vector.load %arg3[%68, %c0_13, %c0_14] : memref<4x16x16xf32, #tpu.memory_space<vmem>>, vector<1x16x16xf32>
    %70 = vector.shape_cast %69 : vector<1x16x16xf32> to vector<16x16xf32>
    %71 = arith.mulf %67, %67 : vector<16x16xf32>
    %72 = arith.mulf %70, %70 : vector<16x16xf32>
    %73 = arith.mulf %67, %70 : vector<16x16xf32>
    %74 = tpu.concatenate %67, %70, %71, %72, %73 in 1 : vector<16x16xf32>, vector<16x16xf32>, vector<16x16xf32>, vector<16x16xf32>, vector<16x16xf32> -> vector<16x80xf32>
    %cst_15 = arith.constant dense<0.000000e+00> : vector<16x80xf32>
    %75 = tpu.matmul %12, %74, %cst_15 {dimension_numbers = #tpu.dot_dimension_numbers<[1], [0], [0], [1], [0, 0, 1, 1], [], []>} : vector<16x16xf32>, vector<16x80xf32>, vector<16x80xf32> -> vector<16x80xf32>
    %76 = vector.extract_strided_slice %75 {offsets = [0, 0], sizes = [16, 16], strides = [1, 1]} : vector<16x80xf32> to vector<16x16xf32>
    %77 = vector.extract_strided_slice %75 {offsets = [0, 16], sizes = [16, 16], strides = [1, 1]} : vector<16x80xf32> to vector<16x16xf32>
    %78 = vector.extract_strided_slice %75 {offsets = [0, 32], sizes = [16, 16], strides = [1, 1]} : vector<16x80xf32> to vector<16x16xf32>
    %79 = vector.extract_strided_slice %75 {offsets = [0, 48], sizes = [16, 16], strides = [1, 1]} : vector<16x80xf32> to vector<16x16xf32>
    %80 = vector.extract_strided_slice %75 {offsets = [0, 64], sizes = [16, 16], strides = [1, 1]} : vector<16x80xf32> to vector<16x16xf32>
    %81 = tpu.concatenate %76, %77, %78, %79, %80 in 0 : vector<16x16xf32>, vector<16x16xf32>, vector<16x16xf32>, vector<16x16xf32>, vector<16x16xf32> -> vector<80x16xf32>
    %cst_16 = arith.constant dense<0.000000e+00> : vector<80x16xf32>
    %82 = tpu.matmul %81, %22, %cst_16 {dimension_numbers = #tpu.dot_dimension_numbers<[1], [0], [0], [1], [0, 0, 1, 1], [], []>} : vector<80x16xf32>, vector<16x16xf32>, vector<80x16xf32> -> vector<80x16xf32>
    %83 = vector.extract_strided_slice %82 {offsets = [0, 0], sizes = [16, 16], strides = [1, 1]} : vector<80x16xf32> to vector<16x16xf32>
    %84 = vector.extract_strided_slice %82 {offsets = [16, 0], sizes = [16, 16], strides = [1, 1]} : vector<80x16xf32> to vector<16x16xf32>
    %85 = vector.extract_strided_slice %82 {offsets = [32, 0], sizes = [16, 16], strides = [1, 1]} : vector<80x16xf32> to vector<16x16xf32>
    %86 = vector.extract_strided_slice %82 {offsets = [48, 0], sizes = [16, 16], strides = [1, 1]} : vector<80x16xf32> to vector<16x16xf32>
    %87 = vector.extract_strided_slice %82 {offsets = [64, 0], sizes = [16, 16], strides = [1, 1]} : vector<80x16xf32> to vector<16x16xf32>
    %88 = arith.mulf %83, %84 : vector<16x16xf32>
    %89 = vector.broadcast %cst_3 : f32 to vector<16x16xf32>
    %90 = arith.mulf %88, %89 : vector<16x16xf32>
    %91 = arith.subf %87, %90 : vector<16x16xf32>
    %92 = arith.mulf %83, %83 : vector<16x16xf32>
    %93 = vector.broadcast %cst_3 : f32 to vector<16x16xf32>
    %94 = arith.mulf %92, %93 : vector<16x16xf32>
    %95 = arith.subf %85, %94 : vector<16x16xf32>
    %96 = arith.mulf %84, %84 : vector<16x16xf32>
    %97 = vector.broadcast %cst_3 : f32 to vector<16x16xf32>
    %98 = arith.mulf %96, %97 : vector<16x16xf32>
    %99 = arith.subf %86, %98 : vector<16x16xf32>
    %100 = arith.mulf %91, %91 : vector<16x16xf32>
    %101 = arith.mulf %95, %99 : vector<16x16xf32>
    %102 = vector.broadcast %cst_4 : f32 to vector<16x16xf32>
    %103 = arith.addf %101, %102 : vector<16x16xf32>
    %104 = arith.divf %100, %103 : vector<16x16xf32>
    %105 = arith.addf %64, %104 : vector<16x16xf32>
    %c2_i32 = arith.constant 2 : i32
    %106 = arith.index_cast %c2_i32 : i32 to index
    %c0_17 = arith.constant 0 : index
    %c0_18 = arith.constant 0 : index
    %107 = vector.load %arg2[%106, %c0_17, %c0_18] : memref<4x16x16xf32, #tpu.memory_space<vmem>>, vector<1x16x16xf32>
    %108 = vector.shape_cast %107 : vector<1x16x16xf32> to vector<16x16xf32>
    %109 = arith.index_cast %c2_i32 : i32 to index
    %c0_19 = arith.constant 0 : index
    %c0_20 = arith.constant 0 : index
    %110 = vector.load %arg3[%109, %c0_19, %c0_20] : memref<4x16x16xf32, #tpu.memory_space<vmem>>, vector<1x16x16xf32>
    %111 = vector.shape_cast %110 : vector<1x16x16xf32> to vector<16x16xf32>
    %112 = arith.mulf %108, %108 : vector<16x16xf32>
    %113 = arith.mulf %111, %111 : vector<16x16xf32>
    %114 = arith.mulf %108, %111 : vector<16x16xf32>
    %115 = tpu.concatenate %108, %111, %112, %113, %114 in 1 : vector<16x16xf32>, vector<16x16xf32>, vector<16x16xf32>, vector<16x16xf32>, vector<16x16xf32> -> vector<16x80xf32>
    %cst_21 = arith.constant dense<0.000000e+00> : vector<16x80xf32>
    %116 = tpu.matmul %12, %115, %cst_21 {dimension_numbers = #tpu.dot_dimension_numbers<[1], [0], [0], [1], [0, 0, 1, 1], [], []>} : vector<16x16xf32>, vector<16x80xf32>, vector<16x80xf32> -> vector<16x80xf32>
    %117 = vector.extract_strided_slice %116 {offsets = [0, 0], sizes = [16, 16], strides = [1, 1]} : vector<16x80xf32> to vector<16x16xf32>
    %118 = vector.extract_strided_slice %116 {offsets = [0, 16], sizes = [16, 16], strides = [1, 1]} : vector<16x80xf32> to vector<16x16xf32>
    %119 = vector.extract_strided_slice %116 {offsets = [0, 32], sizes = [16, 16], strides = [1, 1]} : vector<16x80xf32> to vector<16x16xf32>
    %120 = vector.extract_strided_slice %116 {offsets = [0, 48], sizes = [16, 16], strides = [1, 1]} : vector<16x80xf32> to vector<16x16xf32>
    %121 = vector.extract_strided_slice %116 {offsets = [0, 64], sizes = [16, 16], strides = [1, 1]} : vector<16x80xf32> to vector<16x16xf32>
    %122 = tpu.concatenate %117, %118, %119, %120, %121 in 0 : vector<16x16xf32>, vector<16x16xf32>, vector<16x16xf32>, vector<16x16xf32>, vector<16x16xf32> -> vector<80x16xf32>
    %cst_22 = arith.constant dense<0.000000e+00> : vector<80x16xf32>
    %123 = tpu.matmul %122, %22, %cst_22 {dimension_numbers = #tpu.dot_dimension_numbers<[1], [0], [0], [1], [0, 0, 1, 1], [], []>} : vector<80x16xf32>, vector<16x16xf32>, vector<80x16xf32> -> vector<80x16xf32>
    %124 = vector.extract_strided_slice %123 {offsets = [0, 0], sizes = [16, 16], strides = [1, 1]} : vector<80x16xf32> to vector<16x16xf32>
    %125 = vector.extract_strided_slice %123 {offsets = [16, 0], sizes = [16, 16], strides = [1, 1]} : vector<80x16xf32> to vector<16x16xf32>
    %126 = vector.extract_strided_slice %123 {offsets = [32, 0], sizes = [16, 16], strides = [1, 1]} : vector<80x16xf32> to vector<16x16xf32>
    %127 = vector.extract_strided_slice %123 {offsets = [48, 0], sizes = [16, 16], strides = [1, 1]} : vector<80x16xf32> to vector<16x16xf32>
    %128 = vector.extract_strided_slice %123 {offsets = [64, 0], sizes = [16, 16], strides = [1, 1]} : vector<80x16xf32> to vector<16x16xf32>
    %129 = arith.mulf %124, %125 : vector<16x16xf32>
    %130 = vector.broadcast %cst_3 : f32 to vector<16x16xf32>
    %131 = arith.mulf %129, %130 : vector<16x16xf32>
    %132 = arith.subf %128, %131 : vector<16x16xf32>
    %133 = arith.mulf %124, %124 : vector<16x16xf32>
    %134 = vector.broadcast %cst_3 : f32 to vector<16x16xf32>
    %135 = arith.mulf %133, %134 : vector<16x16xf32>
    %136 = arith.subf %126, %135 : vector<16x16xf32>
    %137 = arith.mulf %125, %125 : vector<16x16xf32>
    %138 = vector.broadcast %cst_3 : f32 to vector<16x16xf32>
    %139 = arith.mulf %137, %138 : vector<16x16xf32>
    %140 = arith.subf %127, %139 : vector<16x16xf32>
    %141 = arith.mulf %132, %132 : vector<16x16xf32>
    %142 = arith.mulf %136, %140 : vector<16x16xf32>
    %143 = vector.broadcast %cst_4 : f32 to vector<16x16xf32>
    %144 = arith.addf %142, %143 : vector<16x16xf32>
    %145 = arith.divf %141, %144 : vector<16x16xf32>
    %146 = arith.addf %105, %145 : vector<16x16xf32>
    %c3_i32 = arith.constant 3 : i32
    %147 = arith.index_cast %c3_i32 : i32 to index
    %c0_23 = arith.constant 0 : index
    %c0_24 = arith.constant 0 : index
    %148 = vector.load %arg2[%147, %c0_23, %c0_24] : memref<4x16x16xf32, #tpu.memory_space<vmem>>, vector<1x16x16xf32>
    %149 = vector.shape_cast %148 : vector<1x16x16xf32> to vector<16x16xf32>
    %150 = arith.index_cast %c3_i32 : i32 to index
    %c0_25 = arith.constant 0 : index
    %c0_26 = arith.constant 0 : index
    %151 = vector.load %arg3[%150, %c0_25, %c0_26] : memref<4x16x16xf32, #tpu.memory_space<vmem>>, vector<1x16x16xf32>
    %152 = vector.shape_cast %151 : vector<1x16x16xf32> to vector<16x16xf32>
    %153 = arith.mulf %149, %149 : vector<16x16xf32>
    %154 = arith.mulf %152, %152 : vector<16x16xf32>
    %155 = arith.mulf %149, %152 : vector<16x16xf32>
    %156 = tpu.concatenate %149, %152, %153, %154, %155 in 1 : vector<16x16xf32>, vector<16x16xf32>, vector<16x16xf32>, vector<16x16xf32>, vector<16x16xf32> -> vector<16x80xf32>
    %cst_27 = arith.constant dense<0.000000e+00> : vector<16x80xf32>
    %157 = tpu.matmul %12, %156, %cst_27 {dimension_numbers = #tpu.dot_dimension_numbers<[1], [0], [0], [1], [0, 0, 1, 1], [], []>} : vector<16x16xf32>, vector<16x80xf32>, vector<16x80xf32> -> vector<16x80xf32>
    %158 = vector.extract_strided_slice %157 {offsets = [0, 0], sizes = [16, 16], strides = [1, 1]} : vector<16x80xf32> to vector<16x16xf32>
    %159 = vector.extract_strided_slice %157 {offsets = [0, 16], sizes = [16, 16], strides = [1, 1]} : vector<16x80xf32> to vector<16x16xf32>
    %160 = vector.extract_strided_slice %157 {offsets = [0, 32], sizes = [16, 16], strides = [1, 1]} : vector<16x80xf32> to vector<16x16xf32>
    %161 = vector.extract_strided_slice %157 {offsets = [0, 48], sizes = [16, 16], strides = [1, 1]} : vector<16x80xf32> to vector<16x16xf32>
    %162 = vector.extract_strided_slice %157 {offsets = [0, 64], sizes = [16, 16], strides = [1, 1]} : vector<16x80xf32> to vector<16x16xf32>
    %163 = tpu.concatenate %158, %159, %160, %161, %162 in 0 : vector<16x16xf32>, vector<16x16xf32>, vector<16x16xf32>, vector<16x16xf32>, vector<16x16xf32> -> vector<80x16xf32>
    %cst_28 = arith.constant dense<0.000000e+00> : vector<80x16xf32>
    %164 = tpu.matmul %163, %22, %cst_28 {dimension_numbers = #tpu.dot_dimension_numbers<[1], [0], [0], [1], [0, 0, 1, 1], [], []>} : vector<80x16xf32>, vector<16x16xf32>, vector<80x16xf32> -> vector<80x16xf32>
    %165 = vector.extract_strided_slice %164 {offsets = [0, 0], sizes = [16, 16], strides = [1, 1]} : vector<80x16xf32> to vector<16x16xf32>
    %166 = vector.extract_strided_slice %164 {offsets = [16, 0], sizes = [16, 16], strides = [1, 1]} : vector<80x16xf32> to vector<16x16xf32>
    %167 = vector.extract_strided_slice %164 {offsets = [32, 0], sizes = [16, 16], strides = [1, 1]} : vector<80x16xf32> to vector<16x16xf32>
    %168 = vector.extract_strided_slice %164 {offsets = [48, 0], sizes = [16, 16], strides = [1, 1]} : vector<80x16xf32> to vector<16x16xf32>
    %169 = vector.extract_strided_slice %164 {offsets = [64, 0], sizes = [16, 16], strides = [1, 1]} : vector<80x16xf32> to vector<16x16xf32>
    %170 = arith.mulf %165, %166 : vector<16x16xf32>
    %171 = vector.broadcast %cst_3 : f32 to vector<16x16xf32>
    %172 = arith.mulf %170, %171 : vector<16x16xf32>
    %173 = arith.subf %169, %172 : vector<16x16xf32>
    %174 = arith.mulf %165, %165 : vector<16x16xf32>
    %175 = vector.broadcast %cst_3 : f32 to vector<16x16xf32>
    %176 = arith.mulf %174, %175 : vector<16x16xf32>
    %177 = arith.subf %167, %176 : vector<16x16xf32>
    %178 = arith.mulf %166, %166 : vector<16x16xf32>
    %179 = vector.broadcast %cst_3 : f32 to vector<16x16xf32>
    %180 = arith.mulf %178, %179 : vector<16x16xf32>
    %181 = arith.subf %168, %180 : vector<16x16xf32>
    %182 = arith.mulf %173, %173 : vector<16x16xf32>
    %183 = arith.mulf %177, %181 : vector<16x16xf32>
    %184 = vector.broadcast %cst_4 : f32 to vector<16x16xf32>
    %185 = arith.addf %183, %184 : vector<16x16xf32>
    %186 = arith.divf %182, %185 : vector<16x16xf32>
    %187 = arith.addf %146, %186 : vector<16x16xf32>
    %c4_i32 = arith.constant 4 : i32
    %c0_29 = arith.constant 0 : index
    %c0_30 = arith.constant 0 : index
    %c0_31 = arith.constant 0 : index
    %188 = vector.load %arg4[%c0_29, %c0_30, %c0_31] : memref<1x16x16xf32, #tpu.memory_space<vmem>>, vector<1x16x16xf32>
    %189 = vector.shape_cast %188 : vector<1x16x16xf32> to vector<16x16xf32>
    %190 = arith.addf %189, %187 : vector<16x16xf32>
    %c0_32 = arith.constant 0 : index
    %c0_33 = arith.constant 0 : index
    %c0_34 = arith.constant 0 : index
    %191 = vector.load %arg4[%c0_32, %c0_33, %c0_34] : memref<1x16x16xf32, #tpu.memory_space<vmem>>, vector<1x16x16xf32>
    %192 = vector.shape_cast %191 : vector<1x16x16xf32> to vector<16x16xf32>
    %193 = vector.shape_cast %190 : vector<16x16xf32> to vector<1x16x16xf32>
    tpu.vector_store %arg4[%c0_32, %c0_33, %c0_34], %193 {strides = array<i32>} : memref<1x16x16xf32, #tpu.memory_space<vmem>>, vector<1x16x16xf32>,
    return
  }
  func.func @transform_0(%arg0: i32, %arg1: i32) -> (i32, i32, i32) {
    %c1_i32 = arith.constant 1 : i32
    %0 = arith.muli %arg0, %c1_i32 : i32
    %1 = arith.addi %0, %arg1 : i32
    %c0_i32 = arith.constant 0 : i32
    %c0_i32_0 = arith.constant 0 : i32
    %c0_i32_1 = arith.constant 0 : i32
    return %1, %c0_i32, %c0_i32_0 : i32, i32, i32
  }
  func.func @transform_1(%arg0: i32, %arg1: i32) -> (i32, i32, i32) {
    %c1_i32 = arith.constant 1 : i32
    %0 = arith.muli %arg0, %c1_i32 : i32
    %1 = arith.addi %0, %arg1 : i32
    %c0_i32 = arith.constant 0 : i32
    %c0_i32_0 = arith.constant 0 : i32
    %c0_i32_1 = arith.constant 0 : i32
    return %1, %c0_i32, %c0_i32_0 : i32, i32, i32
  }
  func.func @transform_2(%arg0: i32, %arg1: i32) -> (i32, i32, i32) {
    %c0_i32 = arith.constant 0 : i32
    %c0_i32_0 = arith.constant 0 : i32
    %c0_i32_1 = arith.constant 0 : i32
    return %arg0, %c0_i32, %c0_i32_0 : i32, i32, i32
  }
}

</mosaic_0001>

<llo_original>
// kernel: ncc_loss.1
$region0: #{ncc_loss.1}
  #allocation0 [shape = 'u32[]', space=smem, size = 0x4, offset = 0x4, fixed_abs, tag = 'smem constant byte address 0x4 - core index']
  #allocation1 [shape = 'u32[144,128]{1,0:T(1,128)}', space=vmem, size = 0x12000, scoped, tag = 'internal scratch']
  %s0 = inlined_call_operand.hbm [shape: f32[8,16,16], index: 0, kind: input, shape index: {}]
  %s1 = inlined_call_operand.hbm [shape: f32[8,16,16], index: 1, kind: input, shape index: {}]
  %s2 = inlined_call_operand.vmem [shape: f32[2,16,16], index: 2, kind: output, shape index: {}]
  %s3 = sld [smem:[#allocation0]]
  $region53: #{ncc_loss.1} parent=0
    _
  %s5 = ssub.s32 1, %s3
  %s6 = scalar_select 0, %s5, %s3
  $region1: #{ncc_loss.1} parent=0
    #allocation2 [shape = 'u8[65536]{0}', space=vmem, size = 0x10000, scoped, tag = 'input window, operand 0']
    #allocation3 [shape = 's32[2]{0}', space=sflag, size = 0x8, scoped, tag = 'scoped memory for ncc_loss.1']
    #allocation4 [shape = 'u8[65536]{0}', space=vmem, size = 0x10000, scoped, tag = 'input window, operand 1']
    #allocation5 [shape = 's32[2]{0}', space=sflag, size = 0x8, scoped, tag = 'scoped memory for ncc_loss.1']
    %7 = vsyncpa [#allocation3], 0
    %s8 = scalar_lea.sflag [#allocation3], 1
    %9 = vsyncpa %s8, 0
    %10 = vsyncpa [#allocation5], 0
    %s11 = scalar_lea.sflag [#allocation5], 1
    %12 = vsyncpa %s11, 0
    loop: start=0, step=1, limit=4
    $region2: #{ncc_loss.1} parent=1 // loop_pre_header
      _
    $region3: #{ncc_loss.1} parent=1 // loop_header
      %s14 = sphi 0, %s18
      %p15 = scmp.ge.s32.totalorder %s14, 4
      %s21 = sphi 0, %s33
      %s22 = sphi 0, %s29
      %s23 = sphi 0, %s21
      %s24 = sphi 0, %s22
      %s25 = sphi 0, %s23
      %s26 = sphi 0, %s24
      %s38 = sphi 0, %s40
      %s41 = sphi 0, %s38
      %s42 = sphi 0, %s41
      %s58 = sphi 0, %s42
      %s66 = sphi 0, %s68
      %s69 = sphi 0, %s66
      %s70 = sphi 0, %s69
      %s86 = sphi 0, %s70
      %s92 = sphi 0, %s94
      %s95 = sphi 0, %s92
      %s96 = sphi 0, %s95
      %s112 = sphi 0, %s96
    $region4: #{ncc_loss.1} parent=1 // loop_header_branch
      %17 = sbr.rel (%p15) target = $region8
    $region5: #{ncc_loss.1} parent=1 // loop_body
      %s19 = ssub.s32 %s14, 1
      %s20 = ssub.s32 %s14, 2
      %s27 = sadd.s32 1, %s22
      %p28 = scmp.ge.s32.totalorder %s27, 1
      %s29 = scalar_select %p28, 0, %s27
      %s30 = sadd.s32 1, %s21
      %s31 = scalar_select %p28, %s30, %s21
      %p32 = scmp.ge.s32.totalorder %s31, 2
      %s33 = scalar_select %p32, 0, %s31
      %s34 = sadd.s32 %s21, %s22
      %s35 = sadd.s32 %s33, %s29
      %s36 = ssub.s32 %s34, %s35
      %p37 = scmp.eq.s32.totalorder %s36, 0
      %s39 = sadd.s32 %s38, 1
      %s40 = scalar_select %p37, %s38, %s39
      %p43 = pneg %p37
      %p44 = scmp.eq.s32.totalorder %s14, 1
      %p45 = por %p43, %p44
      %p46 = scmp.ne.s32.totalorder %s38, %s41
      %p47 = scmp.eq.s32.totalorder %s14, 0
      %p48 = por %p46, %p47
      %p49 = scmp.ne.s32.totalorder %s38, %s41
      %p50 = scmp.eq.s32.totalorder %s19, 1
      %p51 = por %p49, %p50
      %p52 = scmp.ne.s32.totalorder %s41, %s42
      %p53 = scmp.eq.s32.totalorder %s19, 0
      %p54 = por %p52, %p53
      %p55 = scmp.ne.s32.totalorder %s41, %s42
      %p56 = scmp.eq.s32.totalorder %s20, 1
      %p57 = por %p55, %p56
      %p59 = scmp.ne.s32.totalorder %s42, %s58
      %p60 = scmp.eq.s32.totalorder %s20, 0
      %p61 = por %p59, %p60
      %s62 = sadd.s32 %s21, %s22
      %s63 = sadd.s32 %s33, %s29
      %s64 = ssub.s32 %s62, %s63
      %p65 = scmp.eq.s32.totalorder %s64, 0
      %s67 = sadd.s32 %s66, 1
      %s68 = scalar_select %p65, %s66, %s67
      %p71 = pneg %p65
      %p72 = scmp.eq.s32.totalorder %s14, 1
      %p73 = por %p71, %p72
      %p74 = scmp.ne.s32.totalorder %s66, %s69
      %p75 = scmp.eq.s32.totalorder %s14, 0
      %p76 = por %p74, %p75
      %p77 = scmp.ne.s32.totalorder %s66, %s69
      %p78 = scmp.eq.s32.totalorder %s19, 1
      %p79 = por %p77, %p78
      %p80 = scmp.ne.s32.totalorder %s69, %s70
      %p81 = scmp.eq.s32.totalorder %s19, 0
      %p82 = por %p80, %p81
      %p83 = scmp.ne.s32.totalorder %s69, %s70
      %p84 = scmp.eq.s32.totalorder %s20, 1
      %p85 = por %p83, %p84
      %p87 = scmp.ne.s32.totalorder %s70, %s86
      %p88 = scmp.eq.s32.totalorder %s20, 0
      %p89 = por %p87, %p88
      %s90 = ssub.s32 %s21, %s33
      %p91 = scmp.eq.s32.totalorder %s90, 0
      %s93 = sadd.s32 %s92, 1
      %s94 = scalar_select %p91, %s92, %s93
      %p97 = pneg %p91
      %p98 = scmp.eq.s32.totalorder %s14, 1
      %p99 = por %p97, %p98
      %p100 = scmp.ne.s32.totalorder %s92, %s95
      %p101 = scmp.eq.s32.totalorder %s14, 0
      %p102 = por %p100, %p101
      %p103 = scmp.ne.s32.totalorder %s92, %s95
      %p104 = scmp.eq.s32.totalorder %s19, 1
      %p105 = por %p103, %p104
      %p106 = scmp.ne.s32.totalorder %s95, %s96
      %p107 = scmp.eq.s32.totalorder %s19, 0
      %p108 = por %p106, %p107
      %p109 = scmp.ne.s32.totalorder %s95, %s96
      %p110 = scmp.eq.s32.totalorder %s20, 1
      %p111 = por %p109, %p110
      %p113 = scmp.ne.s32.totalorder %s96, %s112
      %p114 = scmp.eq.s32.totalorder %s20, 0
      %p115 = por %p113, %p114
      %p116 = scmp.le.s32.totalorder 1, %s14
      %p117 = scmp.lt.s32.totalorder %s14, 3
      %p118 = pnand %p116, %p117
      %p119 = pneg %p118
      // Predicated region
      $region9: #{ncc_loss.1} parent=5 // pred_check
        _
      $region10: #{ncc_loss.1} parent=5 // pred_check_branch
        %121 = sbr.rel (%p118) target = $region12
      $region11: #{ncc_loss.1} parent=5 // pred_region
        %s122 = ssub.s32 %s14, 1
      $region12: #{ncc_loss.1} parent=5 // pred_fallthru
        _
      %p123 = scmp.lt.s32.totalorder %s14, 2
      // Predicated region
      $region13: #{ncc_loss.1} parent=5 // pred_check
        %p124 = pneg %p123
      $region14: #{ncc_loss.1} parent=5 // pred_check_branch
        %126 = sbr.rel (%p124) target = $region16
      $region15: #{ncc_loss.1} parent=5 // pred_region
        // Predicated region
        $region17: #{ncc_loss.1} parent=15 // pred_check
          %p127 = pneg %p48
        $region18: #{ncc_loss.1} parent=15 // pred_check_branch
          %129 = sbr.rel (%p127) target = $region20
        $region19: #{ncc_loss.1} parent=15 // pred_region
          %s130 = sand.u32 %s38, 1
          %s131 = scalar_lea.sflag [#allocation3], %s130
          %s132 = sand.u32 %s38, 1
          %s133 = smul.addr %s132, 64
          %s134 = scalar_lea.vmem [#allocation2], %s133
          %s135 = sadd.s32 %s21, %s22
          %s136 = smul.u32 4, %s135
          %s138 = ssub.s32 1024, 1024
          %139 = vsyncadd %s131, %s138
          %s140 = smul.addr %s136, 2
          %s141 = smul.addr %s140, 128
          %s142 = scalar_lea.hbm %s0, %s141
          %s143 = sshll.u32 %s134, 4
          %s144 = int_to_ptr.vmem [resolvable:$true] %s143
          %149 = dma.hbm_to_vmem [thread:$0]  %s142, 1024, %s144, %s131, 128, 128, 8
        $region20: #{ncc_loss.1} parent=15 // pred_fallthru
          _
        // Predicated region
        $region21: #{ncc_loss.1} parent=15 // pred_check
          %p150 = pneg %p76
        $region22: #{ncc_loss.1} parent=15 // pred_check_branch
          %152 = sbr.rel (%p150) target = $region24
        $region23: #{ncc_loss.1} parent=15 // pred_region
          %s153 = sand.u32 %s66, 1
          %s154 = scalar_lea.sflag [#allocation5], %s153
          %s155 = sand.u32 %s66, 1
          %s156 = smul.addr %s155, 64
          %s157 = scalar_lea.vmem [#allocation4], %s156
          %s158 = sadd.s32 %s21, %s22
          %s159 = smul.u32 4, %s158
          %s161 = ssub.s32 1024, 1024
          %162 = vsyncadd %s154, %s161
          %s163 = smul.addr %s159, 2
          %s164 = smul.addr %s163, 128
          %s165 = scalar_lea.hbm %s1, %s164
          %s166 = sshll.u32 %s157, 4
          %s167 = int_to_ptr.vmem [resolvable:$true] %s166
          %172 = dma.hbm_to_vmem [thread:$0]  %s165, 1024, %s167, %s154, 128, 128, 8
        $region24: #{ncc_loss.1} parent=15 // pred_fallthru
          _
      $region16: #{ncc_loss.1} parent=5 // pred_fallthru
        _
      %p173 = scmp.le.s32.totalorder 1, %s14
      %p174 = scmp.lt.s32.totalorder %s14, 3
      %p175 = pnand %p173, %p174
      %p176 = pneg %p175
      // Predicated region
      $region25: #{ncc_loss.1} parent=5 // pred_check
        _
      $region26: #{ncc_loss.1} parent=5 // pred_check_branch
        %178 = sbr.rel (%p175) target = $region28
      $region27: #{ncc_loss.1} parent=5 // pred_region
        %s179 = ssub.s32 %s14, 1
        %s180 = sand.u32 %s41, 1
        %s181 = scalar_lea.sflag [#allocation3], %s180
        %s182 = sand.u32 %s41, 1
        %s183 = smul.addr %s182, 64
        %s184 = scalar_lea.vmem [#allocation2], %s183
        // Predicated region
        $region29: #{ncc_loss.1} parent=27 // pred_check
          %p185 = pneg %p54
        $region30: #{ncc_loss.1} parent=27 // pred_check_branch
          %187 = sbr.rel (%p185) target = $region32
        $region31: #{ncc_loss.1} parent=27 // pred_region
          %188 = dma.done %s181, 1024
        $region32: #{ncc_loss.1} parent=27 // pred_fallthru
          _
        %s189 = sand.u32 %s69, 1
        %s190 = scalar_lea.sflag [#allocation5], %s189
        %s191 = sand.u32 %s69, 1
        %s192 = smul.addr %s191, 64
        %s193 = scalar_lea.vmem [#allocation4], %s192
        // Predicated region
        $region33: #{ncc_loss.1} parent=27 // pred_check
          %p194 = pneg %p82
        $region34: #{ncc_loss.1} parent=27 // pred_check_branch
          %196 = sbr.rel (%p194) target = $region36
        $region35: #{ncc_loss.1} parent=27 // pred_region
          %197 = dma.done %s190, 1024
        $region36: #{ncc_loss.1} parent=27 // pred_fallthru
          _
        %s198 = sand.u32 %s41, 1
        %s199 = scalar_lea.sflag [#allocation3], %s198
        %s200 = sand.u32 %s41, 1
        %s201 = smul.addr %s200, 64
        %s202 = scalar_lea.vmem [#allocation2], %s201
        %p203 = pneg %p54
        %p204 = pneg %p51
        %s205 = sand.u32 %s69, 1
        %s206 = scalar_lea.sflag [#allocation5], %s205
        %s207 = sand.u32 %s69, 1
        %s208 = smul.addr %s207, 64
        %s209 = scalar_lea.vmem [#allocation4], %s208
        %p210 = pneg %p82
        %p211 = pneg %p79
        %p212 = pneg %p108
        %p213 = pneg %p105
        %p214 = scmp.lt.s32.totalorder %s23, 1
        %s215 = scalar_select %p214, %s23, 1
        %s216 = smul.addr %s215, 2
        %s217 = smul.addr %s216, 8
        %s218 = scalar_lea.vmem %s2, %s217
        %s219 = sadd.s32 %s23, %s24
        %s220 = smul.u32 4, %s219
        %s221 = sadd.s32 %s23, %s24
        %s222 = smul.u32 4, %s221
        %p223 = scmp.lt.s32.totalorder %s23, 1
        %s224 = scalar_select %p223, %s23, 1
        %s225 = smul.addr %s224, 2
        %s226 = smul.addr %s225, 8
        %s227 = scalar_lea.vmem %s2, %s226
        %p228 = scmp.eq.s32.totalorder %s24, 0
        // Predicated region
        $region37: #{ncc_loss.1} parent=27 // pred_check
          %p229 = pneg %p228
        $region38: #{ncc_loss.1} parent=27 // pred_check_branch
          %231 = sbr.rel (%p229) target = $region40
        $region39: #{ncc_loss.1} parent=27 // pred_region
          %vm232 = vcmask 130048
          %233 = vst.msk [vmem:[%s227] sm:$0xff] %vm232, 0.0
          %234 = vst.msk [vmem:[%s227 + $0x8] sm:$0xff] %vm232, 0.0
        $region40: #{ncc_loss.1} parent=27 // pred_fallthru
          _
        %v235 = vlaneseq
        %v236 = vshrl.u32 %v235, 7
        %v237 = vadd.s32 %v236, 8
        %v238 = vlaneseq
        %v239 = vand.u32 %v238, 127
        %v240 = vsub.s32 %v239, %v236
        %v241 = vsub.s32 %v239, %v237
        %vm242 = vcmp.ge.s32.totalorder %v240, 4294967286
        %vm243 = vcmp.ge.s32.totalorder %v241, 4294967286
        %vm244 = vcmp.le.s32.totalorder %v240, 10
        %vm245 = vcmp.le.s32.totalorder %v241, 10
        %vm246 = vmand %vm242, %vm244
        %vm247 = vmand %vm243, %vm245
        %v248 = vsel %vm246, 1, 0
        %v249 = vsel %vm247, 1, 0
        %v250 = vcvt.s32.f32 %v248
        %v251 = vcvt.s32.f32 %v249
        %v252 = vsub.s32 %v236, %v239
        %v253 = vsub.s32 %v237, %v239
        %vm254 = vcmp.ge.s32.totalorder %v252, 4294967286
        %vm255 = vcmp.ge.s32.totalorder %v253, 4294967286
        %vm256 = vcmp.le.s32.totalorder %v252, 10
        %vm257 = vcmp.le.s32.totalorder %v253, 10
        %vm258 = vmand %vm254, %vm256
        %vm259 = vmand %vm255, %vm257
        %v260 = vsel %vm258, 1, 0
        %v261 = vsel %vm259, 1, 0
        %v262 = vcvt.s32.f32 %v260
        %v263 = vcvt.s32.f32 %v261
        %v264 = vld [vmem:[%s184] sm:$0xff]
        %v265 = vld [vmem:[%s184 + $0x8] sm:$0xff]
        %v266 = vld [vmem:[%s193] sm:$0xff]
        %v267 = vld [vmem:[%s193 + $0x8] sm:$0xff]
        %v268 = vmul.f32 %v264, %v264
        %v269 = vmul.f32 %v265, %v265
        %v270 = vmul.f32 %v266, %v266
        %v271 = vmul.f32 %v267, %v267
        %v272 = vmul.f32 %v264, %v266
        %v273 = vmul.f32 %v265, %v267
        %276 = vrot.lane.b32.xlu0 %v266, 16
        %v277 = vpop.permute.xlu0 %276
        %278 = vrot.lane.b32.xlu0 %v267, 16
        %v279 = vpop.permute.xlu0 %278
        %284 = vrot.lane.b32.xlu0 %v268, 32
        %v285 = vpop.permute.xlu0 %284
        %286 = vrot.lane.b32.xlu0 %v269, 32
        %v287 = vpop.permute.xlu0 %286
        %292 = vrot.lane.b32.xlu0 %v270, 48
        %v293 = vpop.permute.xlu0 %292
        %294 = vrot.lane.b32.xlu0 %v271, 48
        %v295 = vpop.permute.xlu0 %294
        %300 = vrot.lane.b32.xlu0 %v272, 64
        %v301 = vpop.permute.xlu0 %300
        %302 = vrot.lane.b32.xlu0 %v273, 64
        %v303 = vpop.permute.xlu0 %302
        %vm306 = vcmask 130048
        %v307 = vsel %vm306, %v264, %v277
        %v308 = vsel %vm306, %v265, %v279
        %vm309 = vcmask 261120
        %v310 = vsel %vm309, %v307, %v285
        %v311 = vsel %vm309, %v308, %v287
        %vm312 = vcmask 392192
        %v313 = vsel %vm312, %v310, %v293
        %v314 = vsel %vm312, %v311, %v295
        %vm315 = vcmask 523264
        %v316 = vsel %vm315, %v313, %v301
        %v317 = vsel %vm315, %v314, %v303
        %v319 = vsel %vm306, %v250, 0
        %v322 = vsel %vm306, %v251, 0
        %324 = vmatprep.subr.mxu0 0.0
        %325 = vmatpush1.msra.mxu0 %v316
        %326 = vmatprep.subr.mxu0 0.0
        %327 = vmatpush1.msra.mxu0 %v317
        %328 = vmatprep.subr.mxu0 0.0
        %329 = vmatpush1.msra.mxu0 0.0
        %330 = vmatprep.subr.mxu0 0.0
        %331 = vmatpush1.msra.mxu0 0.0
        %332 = vmatprep.subr.mxu0 0.0
        %333 = vmatpush1.msra.mxu0 0.0
        %334 = vmatprep.subr.mxu0 0.0
        %335 = vmatpush1.msra.mxu0 0.0
        %336 = vmatprep.subr.mxu0 0.0
        %337 = vmatpush1.msra.mxu0 0.0
        %338 = vmatprep.subr.mxu0 0.0
        %339 = vmatpush1.msra.mxu0 0.0
        %340 = vmatprep.subr.mxu0 0.0
        %341 = vmatpush1.msra.mxu0 0.0
        %342 = vmatprep.subr.mxu0 0.0
        %343 = vmatpush1.msra.mxu0 0.0
        %344 = vmatprep.subr.mxu0 0.0
        %345 = vmatpush1.msra.mxu0 0.0
        %346 = vmatprep.subr.mxu0 0.0
        %347 = vmatpush1.msra.mxu0 0.0
        %348 = vmatprep.subr.mxu0 0.0
        %349 = vmatpush1.msra.mxu0 0.0
        %350 = vmatprep.subr.mxu0 0.0
        %351 = vmatpush1.msra.mxu0 0.0
        %352 = vmatprep.subr.mxu0 0.0
        %353 = vmatpush1.msra.mxu0 0.0
        %354 = vmatprep.subr.mxu0 0.0
        %355 = vmatpush1.msra.mxu0 0.0
        %356 = vmatprep.subr.mxu0 0.0
        %357 = vmatpush1.msra.mxu0 0.0
        %358 = vmatprep.subr.mxu0 0.0
        %359 = vmatpush1.msra.mxu0 0.0
        %360 = vmatprep.subr.mxu0 0.0
        %361 = vmatpush1.msra.mxu0 0.0
        %362 = vmatprep.subr.mxu0 0.0
        %363 = vmatpush1.msra.mxu0 0.0
        %364 = vmatprep.subr.mxu0 0.0
        %365 = vmatpush1.msra.mxu0 0.0
        %366 = vmatprep.subr.mxu0 0.0
        %367 = vmatpush1.msra.mxu0 0.0
        %368 = vmatprep.subr.mxu0 0.0
        %369 = vmatpush1.msra.mxu0 0.0
        %370 = vmatprep.subr.mxu0 0.0
        %371 = vmatpush1.msra.mxu0 0.0
        %372 = vmatprep.subr.mxu0 0.0
        %373 = vmatpush1.msra.mxu0 0.0
        %374 = vmatprep.subr.mxu0 0.0
        %375 = vmatpush1.msra.mxu0 0.0
        %376 = vmatprep.subr.mxu0 0.0
        %377 = vmatpush1.msra.mxu0 0.0
        %378 = vmatprep.subr.mxu0 0.0
        %379 = vmatpush1.msra.mxu0 0.0
        %380 = vmatprep.subr.mxu0 0.0
        %381 = vmatpush1.msra.mxu0 0.0
        %382 = vmatprep.subr.mxu0 0.0
        %383 = vmatpush1.msra.mxu0 0.0
        %384 = vmatprep.subr.mxu0 0.0
        %385 = vmatpush1.msra.mxu0 0.0
        %386 = vmatprep.subr.mxu0 0.0
        %387 = vmatpush1.msra.mxu0 0.0
        %388 = vmatprep.mubr.f32.mxu0 0.0
        %389 = vmatmul.mubr.f32.gmra.mrb[0].mxu0 %v319
        %v390 = vpop.f32.mrb[0].mxu0
        %v391 = vadd.f32 0.0, %v390
        %v392 = vpop.f32.mrb[0].mxu0
        %393 = vmatprep.mubr.f32.mxu0 0.0
        %394 = vmatmul.mubr.f32.gmra.mrb[0].mxu0 %v322
        %v395 = vpop.f32.mrb[0].mxu0
        %v396 = vadd.f32 0.0, %v395
        %v397 = vpop.f32.mrb[0].mxu0
        %398 = vdwg.mxu0
        %401 = vrot.lane.b32.xlu0 %v391, 112
        %v402 = vpop.permute.xlu0 %401
        %403 = vrot.lane.b32.xlu0 %v396, 112
        %v404 = vpop.permute.xlu0 %403
        %405 = vrot.lane.b32.xlu0 %v391, 96
        %v406 = vpop.permute.xlu0 %405
        %407 = vrot.lane.b32.xlu0 %v396, 96
        %v408 = vpop.permute.xlu0 %407
        %409 = vrot.lane.b32.xlu0 %v391, 80
        %v410 = vpop.permute.xlu0 %409
        %411 = vrot.lane.b32.xlu0 %v396, 80
        %v412 = vpop.permute.xlu0 %411
        %413 = vrot.lane.b32.xlu0 %v391, 64
        %v414 = vpop.permute.xlu0 %413
        %415 = vrot.lane.b32.xlu0 %v396, 64
        %v416 = vpop.permute.xlu0 %415
        %v417 = vsel %vm306, %v391, 0
        %v419 = vsel %vm306, %v396, 0
        %v421 = vsel %vm306, %v402, 0
        %v423 = vsel %vm306, %v404, 0
        %v425 = vsel %vm306, %v406, 0
        %v427 = vsel %vm306, %v408, 0
        %v429 = vsel %vm306, %v410, 0
        %v431 = vsel %vm306, %v412, 0
        %v433 = vsel %vm306, %v414, 0
        %v435 = vsel %vm306, %v416, 0
        %437 = vmatprep.subr.mxu0 0.0
        %438 = vmatpush1.msra.mxu0 %v262
        %439 = vmatprep.subr.mxu0 0.0
        %440 = vmatpush1.msra.mxu0 %v263
        %441 = vmatprep.subr.mxu0 0.0
        %442 = vmatpush1.msra.mxu0 0.0
        %443 = vmatprep.subr.mxu0 0.0
        %444 = vmatpush1.msra.mxu0 0.0
        %445 = vmatprep.subr.mxu0 0.0
        %446 = vmatpush1.msra.mxu0 0.0
        %447 = vmatprep.subr.mxu0 0.0
        %448 = vmatpush1.msra.mxu0 0.0
        %449 = vmatprep.subr.mxu0 0.0
        %450 = vmatpush1.msra.mxu0 0.0
        %451 = vmatprep.subr.mxu0 0.0
        %452 = vmatpush1.msra.mxu0 0.0
        %453 = vmatprep.subr.mxu0 0.0
        %454 = vmatpush1.msra.mxu0 0.0
        %455 = vmatprep.subr.mxu0 0.0
        %456 = vmatpush1.msra.mxu0 0.0
        %457 = vmatprep.subr.mxu0 0.0
        %458 = vmatpush1.msra.mxu0 0.0
        %459 = vmatprep.subr.mxu0 0.0
        %460 = vmatpush1.msra.mxu0 0.0
        %461 = vmatprep.subr.mxu0 0.0
        %462 = vmatpush1.msra.mxu0 0.0
        %463 = vmatprep.subr.mxu0 0.0
        %464 = vmatpush1.msra.mxu0 0.0
        %465 = vmatprep.subr.mxu0 0.0
        %466 = vmatpush1.msra.mxu0 0.0
        %467 = vmatprep.subr.mxu0 0.0
        %468 = vmatpush1.msra.mxu0 0.0
        %469 = vmatprep.subr.mxu0 0.0
        %470 = vmatpush1.msra.mxu0 0.0
        %471 = vmatprep.subr.mxu0 0.0
        %472 = vmatpush1.msra.mxu0 0.0
        %473 = vmatprep.subr.mxu0 0.0
        %474 = vmatpush1.msra.mxu0 0.0
        %475 = vmatprep.subr.mxu0 0.0
        %476 = vmatpush1.msra.mxu0 0.0
        %477 = vmatprep.subr.mxu0 0.0
        %478 = vmatpush1.msra.mxu0 0.0
        %479 = vmatprep.subr.mxu0 0.0
        %480 = vmatpush1.msra.mxu0 0.0
        %481 = vmatprep.subr.mxu0 0.0
        %482 = vmatpush1.msra.mxu0 0.0
        %483 = vmatprep.subr.mxu0 0.0
        %484 = vmatpush1.msra.mxu0 0.0
        %485 = vmatprep.subr.mxu0 0.0
        %486 = vmatpush1.msra.mxu0 0.0
        %487 = vmatprep.subr.mxu0 0.0
        %488 = vmatpush1.msra.mxu0 0.0
        %489 = vmatprep.subr.mxu0 0.0
        %490 = vmatpush1.msra.mxu0 0.0
        %491 = vmatprep.subr.mxu0 0.0
        %492 = vmatpush1.msra.mxu0 0.0
        %493 = vmatprep.subr.mxu0 0.0
        %494 = vmatpush1.msra.mxu0 0.0
        %495 = vmatprep.subr.mxu0 0.0
        %496 = vmatpush1.msra.mxu0 0.0
        %497 = vmatprep.subr.mxu0 0.0
        %498 = vmatpush1.msra.mxu0 0.0
        %499 = vmatprep.subr.mxu0 0.0
        %500 = vmatpush1.msra.mxu0 0.0
        %501 = vmatprep.mubr.f32.mxu0 0.0
        %502 = vmatmul.mubr.f32.gmra.mrb[0].mxu0 %v417
        %v503 = vpop.f32.mrb[0].mxu0
        %v504 = vadd.f32 0.0, %v503
        %v505 = vpop.f32.mrb[0].mxu0
        %506 = vmatprep.mubr.f32.mxu0 0.0
        %507 = vmatmul.mubr.f32.gmra.mrb[0].mxu0 %v419
        %v508 = vpop.f32.mrb[0].mxu0
        %v509 = vadd.f32 0.0, %v508
        %v510 = vpop.f32.mrb[0].mxu0
        %511 = vmatprep.mubr.f32.mxu0 0.0
        %512 = vmatmul.mubr.f32.gmra.mrb[0].mxu0 %v421
        %v513 = vpop.f32.mrb[0].mxu0
        %v514 = vadd.f32 0.0, %v513
        %v515 = vpop.f32.mrb[0].mxu0
        %516 = vmatprep.mubr.f32.mxu0 0.0
        %517 = vmatmul.mubr.f32.gmra.mrb[0].mxu0 %v423
        %v518 = vpop.f32.mrb[0].mxu0
        %v519 = vadd.f32 0.0, %v518
        %v520 = vpop.f32.mrb[0].mxu0
        %521 = vmatprep.mubr.f32.mxu0 0.0
        %522 = vmatmul.mubr.f32.gmra.mrb[0].mxu0 %v425
        %v523 = vpop.f32.mrb[0].mxu0
        %v524 = vadd.f32 0.0, %v523
        %v525 = vpop.f32.mrb[0].mxu0
        %526 = vmatprep.mubr.f32.mxu0 0.0
        %527 = vmatmul.mubr.f32.gmra.mrb[0].mxu0 %v427
        %v528 = vpop.f32.mrb[0].mxu0
        %v529 = vadd.f32 0.0, %v528
        %v530 = vpop.f32.mrb[0].mxu0
        %531 = vmatprep.mubr.f32.mxu0 0.0
        %532 = vmatmul.mubr.f32.gmra.mrb[0].mxu0 %v429
        %v533 = vpop.f32.mrb[0].mxu0
        %v534 = vadd.f32 0.0, %v533
        %v535 = vpop.f32.mrb[0].mxu0
        %536 = vmatprep.mubr.f32.mxu0 0.0
        %537 = vmatmul.mubr.f32.gmra.mrb[0].mxu0 %v431
        %v538 = vpop.f32.mrb[0].mxu0
        %v539 = vadd.f32 0.0, %v538
        %v540 = vpop.f32.mrb[0].mxu0
        %541 = vmatprep.mubr.f32.mxu0 0.0
        %542 = vmatmul.mubr.f32.gmra.mrb[0].mxu0 %v433
        %v543 = vpop.f32.mrb[0].mxu0
        %v544 = vadd.f32 0.0, %v543
        %v545 = vpop.f32.mrb[0].mxu0
        %546 = vmatprep.mubr.f32.mxu0 0.0
        %547 = vmatmul.mubr.f32.gmra.mrb[0].mxu0 %v435
        %v548 = vpop.f32.mrb[0].mxu0
        %v549 = vadd.f32 0.0, %v548
        %v550 = vpop.f32.mrb[0].mxu0
        %551 = vdwg.mxu0
        %v552 = vmul.f32 %v504, %v514
        %v553 = vmul.f32 %v509, %v519
        %v554 = vmul.f32 %v552, 0.0001079797
        %v555 = vmul.f32 %v553, 0.0001079797
        %v556 = vsub.f32 %v544, %v554
        %v557 = vsub.f32 %v549, %v555
        %v558 = vmul.f32 %v504, %v504
        %v559 = vmul.f32 %v509, %v509
        %v560 = vmul.f32 %v558, 0.0001079797
        %v561 = vmul.f32 %v559, 0.0001079797
        %v562 = vsub.f32 %v524, %v560
        %v563 = vsub.f32 %v529, %v561
        %v564 = vmul.f32 %v514, %v514
        %v565 = vmul.f32 %v519, %v519
        %v566 = vmul.f32 %v564, 0.0001079797
        %v567 = vmul.f32 %v565, 0.0001079797
        %v568 = vsub.f32 %v534, %v566
        %v569 = vsub.f32 %v539, %v567
        %v570 = vmul.f32 %v556, %v556
        %v571 = vmul.f32 %v557, %v557
        %v572 = vmul.f32 %v562, %v568
        %v573 = vmul.f32 %v563, %v569
        %v574 = vadd.f32 %v572, 1e-05
        %v575 = vadd.f32 %v573, 1e-05
        %v576 = vrcp.pop %v574
        %v577 = vmul.f32 %v570, %v576
        %v578 = vrcp.pop %v575
        %v579 = vmul.f32 %v571, %v578
        %v580 = vadd.f32 %v577, 0.0
        %v581 = vadd.f32 %v579, 0.0
        %s582 = scalar_lea.vmem %s184, 16 [#allocation2]
        %v583 = vld [vmem:[%s582] sm:$0xff]
        %v584 = vld [vmem:[%s582 + $0x8] sm:$0xff]
        %s585 = scalar_lea.vmem %s193, 16 [#allocation4]
        %v586 = vld [vmem:[%s585] sm:$0xff]
        %v587 = vld [vmem:[%s585 + $0x8] sm:$0xff]
        %v588 = vmul.f32 %v583, %v583
        %v589 = vmul.f32 %v584, %v584
        %v590 = vmul.f32 %v586, %v586
        %v591 = vmul.f32 %v587, %v587
        %v592 = vmul.f32 %v583, %v586
        %v593 = vmul.f32 %v584, %v587
        %596 = vrot.lane.b32.xlu0 %v586, 16
        %v597 = vpop.permute.xlu0 %596
        %598 = vrot.lane.b32.xlu0 %v587, 16
        %v599 = vpop.permute.xlu0 %598
        %604 = vrot.lane.b32.xlu0 %v588, 32
        %v605 = vpop.permute.xlu0 %604
        %606 = vrot.lane.b32.xlu0 %v589, 32
        %v607 = vpop.permute.xlu0 %606
        %612 = vrot.lane.b32.xlu0 %v590, 48
        %v613 = vpop.permute.xlu0 %612
        %614 = vrot.lane.b32.xlu0 %v591, 48
        %v615 = vpop.permute.xlu0 %614
        %620 = vrot.lane.b32.xlu0 %v592, 64
        %v621 = vpop.permute.xlu0 %620
        %622 = vrot.lane.b32.xlu0 %v593, 64
        %v623 = vpop.permute.xlu0 %622
        %v626 = vsel %vm306, %v583, %v597
        %v627 = vsel %vm306, %v584, %v599
        %v628 = vsel %vm309, %v626, %v605
        %v629 = vsel %vm309, %v627, %v607
        %v630 = vsel %vm312, %v628, %v613
        %v631 = vsel %vm312, %v629, %v615
        %v632 = vsel %vm315, %v630, %v621
        %v633 = vsel %vm315, %v631, %v623
        %634 = vmatprep.subr.mxu0 0.0
        %635 = vmatpush1.msra.mxu0 %v632
        %636 = vmatprep.subr.mxu0 0.0
        %637 = vmatpush1.msra.mxu0 %v633
        %638 = vmatprep.subr.mxu0 0.0
        %639 = vmatpush1.msra.mxu0 0.0
        %640 = vmatprep.subr.mxu0 0.0
        %641 = vmatpush1.msra.mxu0 0.0
        %642 = vmatprep.subr.mxu0 0.0
        %643 = vmatpush1.msra.mxu0 0.0
        %644 = vmatprep.subr.mxu0 0.0
        %645 = vmatpush1.msra.mxu0 0.0
        %646 = vmatprep.subr.mxu0 0.0
        %647 = vmatpush1.msra.mxu0 0.0
        %648 = vmatprep.subr.mxu0 0.0
        %649 = vmatpush1.msra.mxu0 0.0
        %650 = vmatprep.subr.mxu0 0.0
        %651 = vmatpush1.msra.mxu0 0.0
        %652 = vmatprep.subr.mxu0 0.0
        %653 = vmatpush1.msra.mxu0 0.0
        %654 = vmatprep.subr.mxu0 0.0
        %655 = vmatpush1.msra.mxu0 0.0
        %656 = vmatprep.subr.mxu0 0.0
        %657 = vmatpush1.msra.mxu0 0.0
        %658 = vmatprep.subr.mxu0 0.0
        %659 = vmatpush1.msra.mxu0 0.0
        %660 = vmatprep.subr.mxu0 0.0
        %661 = vmatpush1.msra.mxu0 0.0
        %662 = vmatprep.subr.mxu0 0.0
        %663 = vmatpush1.msra.mxu0 0.0
        %664 = vmatprep.subr.mxu0 0.0
        %665 = vmatpush1.msra.mxu0 0.0
        %666 = vmatprep.subr.mxu0 0.0
        %667 = vmatpush1.msra.mxu0 0.0
        %668 = vmatprep.subr.mxu0 0.0
        %669 = vmatpush1.msra.mxu0 0.0
        %670 = vmatprep.subr.mxu0 0.0
        %671 = vmatpush1.msra.mxu0 0.0
        %672 = vmatprep.subr.mxu0 0.0
        %673 = vmatpush1.msra.mxu0 0.0
        %674 = vmatprep.subr.mxu0 0.0
        %675 = vmatpush1.msra.mxu0 0.0
        %676 = vmatprep.subr.mxu0 0.0
        %677 = vmatpush1.msra.mxu0 0.0
        %678 = vmatprep.subr.mxu0 0.0
        %679 = vmatpush1.msra.mxu0 0.0
        %680 = vmatprep.subr.mxu0 0.0
        %681 = vmatpush1.msra.mxu0 0.0
        %682 = vmatprep.subr.mxu0 0.0
        %683 = vmatpush1.msra.mxu0 0.0
        %684 = vmatprep.subr.mxu0 0.0
        %685 = vmatpush1.msra.mxu0 0.0
        %686 = vmatprep.subr.mxu0 0.0
        %687 = vmatpush1.msra.mxu0 0.0
        %688 = vmatprep.subr.mxu0 0.0
        %689 = vmatpush1.msra.mxu0 0.0
        %690 = vmatprep.subr.mxu0 0.0
        %691 = vmatpush1.msra.mxu0 0.0
        %692 = vmatprep.subr.mxu0 0.0
        %693 = vmatpush1.msra.mxu0 0.0
        %694 = vmatprep.subr.mxu0 0.0
        %695 = vmatpush1.msra.mxu0 0.0
        %696 = vmatprep.subr.mxu0 0.0
        %697 = vmatpush1.msra.mxu0 0.0
        %698 = vmatprep.mubr.f32.mxu0 0.0
        %699 = vmatmul.mubr.f32.gmra.mrb[0].mxu0 %v319
        %v700 = vpop.f32.mrb[0].mxu0
        %v701 = vadd.f32 0.0, %v700
        %v702 = vpop.f32.mrb[0].mxu0
        %703 = vmatprep.mubr.f32.mxu0 0.0
        %704 = vmatmul.mubr.f32.gmra.mrb[0].mxu0 %v322
        %v705 = vpop.f32.mrb[0].mxu0
        %v706 = vadd.f32 0.0, %v705
        %v707 = vpop.f32.mrb[0].mxu0
        %708 = vdwg.mxu0
        %711 = vrot.lane.b32.xlu0 %v701, 112
        %v712 = vpop.permute.xlu0 %711
        %713 = vrot.lane.b32.xlu0 %v706, 112
        %v714 = vpop.permute.xlu0 %713
        %715 = vrot.lane.b32.xlu0 %v701, 96
        %v716 = vpop.permute.xlu0 %715
        %717 = vrot.lane.b32.xlu0 %v706, 96
        %v718 = vpop.permute.xlu0 %717
        %719 = vrot.lane.b32.xlu0 %v701, 80
        %v720 = vpop.permute.xlu0 %719
        %721 = vrot.lane.b32.xlu0 %v706, 80
        %v722 = vpop.permute.xlu0 %721
        %723 = vrot.lane.b32.xlu0 %v701, 64
        %v724 = vpop.permute.xlu0 %723
        %725 = vrot.lane.b32.xlu0 %v706, 64
        %v726 = vpop.permute.xlu0 %725
        %v727 = vsel %vm306, %v701, 0
        %v729 = vsel %vm306, %v706, 0
        %v731 = vsel %vm306, %v712, 0
        %v733 = vsel %vm306, %v714, 0
        %v735 = vsel %vm306, %v716, 0
        %v737 = vsel %vm306, %v718, 0
        %v739 = vsel %vm306, %v720, 0
        %v741 = vsel %vm306, %v722, 0
        %v743 = vsel %vm306, %v724, 0
        %v745 = vsel %vm306, %v726, 0
        %747 = vmatprep.subr.mxu0 0.0
        %748 = vmatpush1.msra.mxu0 %v262
        %749 = vmatprep.subr.mxu0 0.0
        %750 = vmatpush1.msra.mxu0 %v263
        %751 = vmatprep.subr.mxu0 0.0
        %752 = vmatpush1.msra.mxu0 0.0
        %753 = vmatprep.subr.mxu0 0.0
        %754 = vmatpush1.msra.mxu0 0.0
        %755 = vmatprep.subr.mxu0 0.0
        %756 = vmatpush1.msra.mxu0 0.0
        %757 = vmatprep.subr.mxu0 0.0
        %758 = vmatpush1.msra.mxu0 0.0
        %759 = vmatprep.subr.mxu0 0.0
        %760 = vmatpush1.msra.mxu0 0.0
        %761 = vmatprep.subr.mxu0 0.0
        %762 = vmatpush1.msra.mxu0 0.0
        %763 = vmatprep.subr.mxu0 0.0
        %764 = vmatpush1.msra.mxu0 0.0
        %765 = vmatprep.subr.mxu0 0.0
        %766 = vmatpush1.msra.mxu0 0.0
        %767 = vmatprep.subr.mxu0 0.0
        %768 = vmatpush1.msra.mxu0 0.0
        %769 = vmatprep.subr.mxu0 0.0
        %770 = vmatpush1.msra.mxu0 0.0
        %771 = vmatprep.subr.mxu0 0.0
        %772 = vmatpush1.msra.mxu0 0.0
        %773 = vmatprep.subr.mxu0 0.0
        %774 = vmatpush1.msra.mxu0 0.0
        %775 = vmatprep.subr.mxu0 0.0
        %776 = vmatpush1.msra.mxu0 0.0
        %777 = vmatprep.subr.mxu0 0.0
        %778 = vmatpush1.msra.mxu0 0.0
        %779 = vmatprep.subr.mxu0 0.0
        %780 = vmatpush1.msra.mxu0 0.0
        %781 = vmatprep.subr.mxu0 0.0
        %782 = vmatpush1.msra.mxu0 0.0
        %783 = vmatprep.subr.mxu0 0.0
        %784 = vmatpush1.msra.mxu0 0.0
        %785 = vmatprep.subr.mxu0 0.0
        %786 = vmatpush1.msra.mxu0 0.0
        %787 = vmatprep.subr.mxu0 0.0
        %788 = vmatpush1.msra.mxu0 0.0
        %789 = vmatprep.subr.mxu0 0.0
        %790 = vmatpush1.msra.mxu0 0.0
        %791 = vmatprep.subr.mxu0 0.0
        %792 = vmatpush1.msra.mxu0 0.0
        %793 = vmatprep.subr.mxu0 0.0
        %794 = vmatpush1.msra.mxu0 0.0
        %795 = vmatprep.subr.mxu0 0.0
        %796 = vmatpush1.msra.mxu0 0.0
        %797 = vmatprep.subr.mxu0 0.0
        %798 = vmatpush1.msra.mxu0 0.0
        %799 = vmatprep.subr.mxu0 0.0
        %800 = vmatpush1.msra.mxu0 0.0
        %801 = vmatprep.subr.mxu0 0.0
        %802 = vmatpush1.msra.mxu0 0.0
        %803 = vmatprep.subr.mxu0 0.0
        %804 = vmatpush1.msra.mxu0 0.0
        %805 = vmatprep.subr.mxu0 0.0
        %806 = vmatpush1.msra.mxu0 0.0
        %807 = vmatprep.subr.mxu0 0.0
        %808 = vmatpush1.msra.mxu0 0.0
        %809 = vmatprep.subr.mxu0 0.0
        %810 = vmatpush1.msra.mxu0 0.0
        %811 = vmatprep.mubr.f32.mxu0 0.0
        %812 = vmatmul.mubr.f32.gmra.mrb[0].mxu0 %v727
        %v813 = vpop.f32.mrb[0].mxu0
        %v814 = vadd.f32 0.0, %v813
        %v815 = vpop.f32.mrb[0].mxu0
        %816 = vmatprep.mubr.f32.mxu0 0.0
        %817 = vmatmul.mubr.f32.gmra.mrb[0].mxu0 %v729
        %v818 = vpop.f32.mrb[0].mxu0
        %v819 = vadd.f32 0.0, %v818
        %v820 = vpop.f32.mrb[0].mxu0
        %821 = vmatprep.mubr.f32.mxu0 0.0
        %822 = vmatmul.mubr.f32.gmra.mrb[0].mxu0 %v731
        %v823 = vpop.f32.mrb[0].mxu0
        %v824 = vadd.f32 0.0, %v823
        %v825 = vpop.f32.mrb[0].mxu0
        %826 = vmatprep.mubr.f32.mxu0 0.0
        %827 = vmatmul.mubr.f32.gmra.mrb[0].mxu0 %v733
        %v828 = vpop.f32.mrb[0].mxu0
        %v829 = vadd.f32 0.0, %v828
        %v830 = vpop.f32.mrb[0].mxu0
        %831 = vmatprep.mubr.f32.mxu0 0.0
        %832 = vmatmul.mubr.f32.gmra.mrb[0].mxu0 %v735
        %v833 = vpop.f32.mrb[0].mxu0
        %v834 = vadd.f32 0.0, %v833
        %v835 = vpop.f32.mrb[0].mxu0
        %836 = vmatprep.mubr.f32.mxu0 0.0
        %837 = vmatmul.mubr.f32.gmra.mrb[0].mxu0 %v737
        %v838 = vpop.f32.mrb[0].mxu0
        %v839 = vadd.f32 0.0, %v838
        %v840 = vpop.f32.mrb[0].mxu0
        %841 = vmatprep.mubr.f32.mxu0 0.0
        %842 = vmatmul.mubr.f32.gmra.mrb[0].mxu0 %v739
        %v843 = vpop.f32.mrb[0].mxu0
        %v844 = vadd.f32 0.0, %v843
        %v845 = vpop.f32.mrb[0].mxu0
        %846 = vmatprep.mubr.f32.mxu0 0.0
        %847 = vmatmul.mubr.f32.gmra.mrb[0].mxu0 %v741
        %v848 = vpop.f32.mrb[0].mxu0
        %v849 = vadd.f32 0.0, %v848
        %v850 = vpop.f32.mrb[0].mxu0
        %851 = vmatprep.mubr.f32.mxu0 0.0
        %852 = vmatmul.mubr.f32.gmra.mrb[0].mxu0 %v743
        %v853 = vpop.f32.mrb[0].mxu0
        %v854 = vadd.f32 0.0, %v853
        %v855 = vpop.f32.mrb[0].mxu0
        %856 = vmatprep.mubr.f32.mxu0 0.0
        %857 = vmatmul.mubr.f32.gmra.mrb[0].mxu0 %v745
        %v858 = vpop.f32.mrb[0].mxu0
        %v859 = vadd.f32 0.0, %v858
        %v860 = vpop.f32.mrb[0].mxu0
        %861 = vdwg.mxu0
        %v862 = vmul.f32 %v814, %v824
        %v863 = vmul.f32 %v819, %v829
        %v864 = vmul.f32 %v862, 0.0001079797
        %v865 = vmul.f32 %v863, 0.0001079797
        %v866 = vsub.f32 %v854, %v864
        %v867 = vsub.f32 %v859, %v865
        %v868 = vmul.f32 %v814, %v814
        %v869 = vmul.f32 %v819, %v819
        %v870 = vmul.f32 %v868, 0.0001079797
        %v871 = vmul.f32 %v869, 0.0001079797
        %v872 = vsub.f32 %v834, %v870
        %v873 = vsub.f32 %v839, %v871
        %v874 = vmul.f32 %v824, %v824
        %v875 = vmul.f32 %v829, %v829
        %v876 = vmul.f32 %v874, 0.0001079797
        %v877 = vmul.f32 %v875, 0.0001079797
        %v878 = vsub.f32 %v844, %v876
        %v879 = vsub.f32 %v849, %v877
        %v880 = vmul.f32 %v866, %v866
        %v881 = vmul.f32 %v867, %v867
        %v882 = vmul.f32 %v872, %v878
        %v883 = vmul.f32 %v873, %v879
        %v884 = vadd.f32 %v882, 1e-05
        %v885 = vadd.f32 %v883, 1e-05
        %v886 = vrcp.pop %v884
        %v887 = vmul.f32 %v880, %v886
        %v888 = vrcp.pop %v885
        %v889 = vmul.f32 %v881, %v888
        %v890 = vadd.f32 %v580, %v887
        %v891 = vadd.f32 %v581, %v889
        %s892 = scalar_lea.vmem %s184, 32 [#allocation2]
        %v893 = vld [vmem:[%s892] sm:$0xff]
        %v894 = vld [vmem:[%s892 + $0x8] sm:$0xff]
        %s895 = scalar_lea.vmem %s193, 32 [#allocation4]
        %v896 = vld [vmem:[%s895] sm:$0xff]
        %v897 = vld [vmem:[%s895 + $0x8] sm:$0xff]
        %v898 = vmul.f32 %v893, %v893
        %v899 = vmul.f32 %v894, %v894
        %v900 = vmul.f32 %v896, %v896
        %v901 = vmul.f32 %v897, %v897
        %v902 = vmul.f32 %v893, %v896
        %v903 = vmul.f32 %v894, %v897
        %906 = vrot.lane.b32.xlu0 %v896, 16
        %v907 = vpop.permute.xlu0 %906
        %908 = vrot.lane.b32.xlu0 %v897, 16
        %v909 = vpop.permute.xlu0 %908
        %914 = vrot.lane.b32.xlu0 %v898, 32
        %v915 = vpop.permute.xlu0 %914
        %916 = vrot.lane.b32.xlu0 %v899, 32
        %v917 = vpop.permute.xlu0 %916
        %922 = vrot.lane.b32.xlu0 %v900, 48
        %v923 = vpop.permute.xlu0 %922
        %924 = vrot.lane.b32.xlu0 %v901, 48
        %v925 = vpop.permute.xlu0 %924
        %930 = vrot.lane.b32.xlu0 %v902, 64
        %v931 = vpop.permute.xlu0 %930
        %932 = vrot.lane.b32.xlu0 %v903, 64
        %v933 = vpop.permute.xlu0 %932
        %v936 = vsel %vm306, %v893, %v907
        %v937 = vsel %vm306, %v894, %v909
        %v938 = vsel %vm309, %v936, %v915
        %v939 = vsel %vm309, %v937, %v917
        %v940 = vsel %vm312, %v938, %v923
        %v941 = vsel %vm312, %v939, %v925
        %v942 = vsel %vm315, %v940, %v931
        %v943 = vsel %vm315, %v941, %v933
        %944 = vmatprep.subr.mxu0 0.0
        %945 = vmatpush1.msra.mxu0 %v942
        %946 = vmatprep.subr.mxu0 0.0
        %947 = vmatpush1.msra.mxu0 %v943
        %948 = vmatprep.subr.mxu0 0.0
        %949 = vmatpush1.msra.mxu0 0.0
        %950 = vmatprep.subr.mxu0 0.0
        %951 = vmatpush1.msra.mxu0 0.0
        %952 = vmatprep.subr.mxu0 0.0
        %953 = vmatpush1.msra.mxu0 0.0
        %954 = vmatprep.subr.mxu0 0.0
        %955 = vmatpush1.msra.mxu0 0.0
        %956 = vmatprep.subr.mxu0 0.0
        %957 = vmatpush1.msra.mxu0 0.0
        %958 = vmatprep.subr.mxu0 0.0
        %959 = vmatpush1.msra.mxu0 0.0
        %960 = vmatprep.subr.mxu0 0.0
        %961 = vmatpush1.msra.mxu0 0.0
        %962 = vmatprep.subr.mxu0 0.0
        %963 = vmatpush1.msra.mxu0 0.0
        %964 = vmatprep.subr.mxu0 0.0
        %965 = vmatpush1.msra.mxu0 0.0
        %966 = vmatprep.subr.mxu0 0.0
        %967 = vmatpush1.msra.mxu0 0.0
        %968 = vmatprep.subr.mxu0 0.0
        %969 = vmatpush1.msra.mxu0 0.0
        %970 = vmatprep.subr.mxu0 0.0
        %971 = vmatpush1.msra.mxu0 0.0
        %972 = vmatprep.subr.mxu0 0.0
        %973 = vmatpush1.msra.mxu0 0.0
        %974 = vmatprep.subr.mxu0 0.0
        %975 = vmatpush1.msra.mxu0 0.0
        %976 = vmatprep.subr.mxu0 0.0
        %977 = vmatpush1.msra.mxu0 0.0
        %978 = vmatprep.subr.mxu0 0.0
        %979 = vmatpush1.msra.mxu0 0.0
        %980 = vmatprep.subr.mxu0 0.0
        %981 = vmatpush1.msra.mxu0 0.0
        %982 = vmatprep.subr.mxu0 0.0
        %983 = vmatpush1.msra.mxu0 0.0
        %984 = vmatprep.subr.mxu0 0.0
        %985 = vmatpush1.msra.mxu0 0.0
        %986 = vmatprep.subr.mxu0 0.0
        %987 = vmatpush1.msra.mxu0 0.0
        %988 = vmatprep.subr.mxu0 0.0
        %989 = vmatpush1.msra.mxu0 0.0
        %990 = vmatprep.subr.mxu0 0.0
        %991 = vmatpush1.msra.mxu0 0.0
        %992 = vmatprep.subr.mxu0 0.0
        %993 = vmatpush1.msra.mxu0 0.0
        %994 = vmatprep.subr.mxu0 0.0
        %995 = vmatpush1.msra.mxu0 0.0
        %996 = vmatprep.subr.mxu0 0.0
        %997 = vmatpush1.msra.mxu0 0.0
        %998 = vmatprep.subr.mxu0 0.0
        %999 = vmatpush1.msra.mxu0 0.0
        %1000 = vmatprep.subr.mxu0 0.0
        %1001 = vmatpush1.msra.mxu0 0.0
        %1002 = vmatprep.subr.mxu0 0.0
        %1003 = vmatpush1.msra.mxu0 0.0
        %1004 = vmatprep.subr.mxu0 0.0
        %1005 = vmatpush1.msra.mxu0 0.0
        %1006 = vmatprep.subr.mxu0 0.0
        %1007 = vmatpush1.msra.mxu0 0.0
        %1008 = vmatprep.mubr.f32.mxu0 0.0
        %1009 = vmatmul.mubr.f32.gmra.mrb[0].mxu0 %v319
        %v1010 = vpop.f32.mrb[0].mxu0
        %v1011 = vadd.f32 0.0, %v1010
        %v1012 = vpop.f32.mrb[0].mxu0
        %1013 = vmatprep.mubr.f32.mxu0 0.0
        %1014 = vmatmul.mubr.f32.gmra.mrb[0].mxu0 %v322
        %v1015 = vpop.f32.mrb[0].mxu0
        %v1016 = vadd.f32 0.0, %v1015
        %v1017 = vpop.f32.mrb[0].mxu0
        %1018 = vdwg.mxu0
        %1021 = vrot.lane.b32.xlu0 %v1011, 112
        %v1022 = vpop.permute.xlu0 %1021
        %1023 = vrot.lane.b32.xlu0 %v1016, 112
        %v1024 = vpop.permute.xlu0 %1023
        %1025 = vrot.lane.b32.xlu0 %v1011, 96
        %v1026 = vpop.permute.xlu0 %1025
        %1027 = vrot.lane.b32.xlu0 %v1016, 96
        %v1028 = vpop.permute.xlu0 %1027
        %1029 = vrot.lane.b32.xlu0 %v1011, 80
        %v1030 = vpop.permute.xlu0 %1029
        %1031 = vrot.lane.b32.xlu0 %v1016, 80
        %v1032 = vpop.permute.xlu0 %1031
        %1033 = vrot.lane.b32.xlu0 %v1011, 64
        %v1034 = vpop.permute.xlu0 %1033
        %1035 = vrot.lane.b32.xlu0 %v1016, 64
        %v1036 = vpop.permute.xlu0 %1035
        %v1037 = vsel %vm306, %v1011, 0
        %v1039 = vsel %vm306, %v1016, 0
        %v1041 = vsel %vm306, %v1022, 0
        %v1043 = vsel %vm306, %v1024, 0
        %v1045 = vsel %vm306, %v1026, 0
        %v1047 = vsel %vm306, %v1028, 0
        %v1049 = vsel %vm306, %v1030, 0
        %v1051 = vsel %vm306, %v1032, 0
        %v1053 = vsel %vm306, %v1034, 0
        %v1055 = vsel %vm306, %v1036, 0
        %1057 = vmatprep.subr.mxu0 0.0
        %1058 = vmatpush1.msra.mxu0 %v262
        %1059 = vmatprep.subr.mxu0 0.0
        %1060 = vmatpush1.msra.mxu0 %v263
        %1061 = vmatprep.subr.mxu0 0.0
        %1062 = vmatpush1.msra.mxu0 0.0
        %1063 = vmatprep.subr.mxu0 0.0
        %1064 = vmatpush1.msra.mxu0 0.0
        %1065 = vmatprep.subr.mxu0 0.0
        %1066 = vmatpush1.msra.mxu0 0.0
        %1067 = vmatprep.subr.mxu0 0.0
        %1068 = vmatpush1.msra.mxu0 0.0
        %1069 = vmatprep.subr.mxu0 0.0
        %1070 = vmatpush1.msra.mxu0 0.0
        %1071 = vmatprep.subr.mxu0 0.0
        %1072 = vmatpush1.msra.mxu0 0.0
        %1073 = vmatprep.subr.mxu0 0.0
        %1074 = vmatpush1.msra.mxu0 0.0
        %1075 = vmatprep.subr.mxu0 0.0
        %1076 = vmatpush1.msra.mxu0 0.0
        %1077 = vmatprep.subr.mxu0 0.0
        %1078 = vmatpush1.msra.mxu0 0.0
        %1079 = vmatprep.subr.mxu0 0.0
        %1080 = vmatpush1.msra.mxu0 0.0
        %1081 = vmatprep.subr.mxu0 0.0
        %1082 = vmatpush1.msra.mxu0 0.0
        %1083 = vmatprep.subr.mxu0 0.0
        %1084 = vmatpush1.msra.mxu0 0.0
        %1085 = vmatprep.subr.mxu0 0.0
        %1086 = vmatpush1.msra.mxu0 0.0
        %1087 = vmatprep.subr.mxu0 0.0
        %1088 = vmatpush1.msra.mxu0 0.0
        %1089 = vmatprep.subr.mxu0 0.0
        %1090 = vmatpush1.msra.mxu0 0.0
        %1091 = vmatprep.subr.mxu0 0.0
        %1092 = vmatpush1.msra.mxu0 0.0
        %1093 = vmatprep.subr.mxu0 0.0
        %1094 = vmatpush1.msra.mxu0 0.0
        %1095 = vmatprep.subr.mxu0 0.0
        %1096 = vmatpush1.msra.mxu0 0.0
        %1097 = vmatprep.subr.mxu0 0.0
        %1098 = vmatpush1.msra.mxu0 0.0
        %1099 = vmatprep.subr.mxu0 0.0
        %1100 = vmatpush1.msra.mxu0 0.0
        %1101 = vmatprep.subr.mxu0 0.0
        %1102 = vmatpush1.msra.mxu0 0.0
        %1103 = vmatprep.subr.mxu0 0.0
        %1104 = vmatpush1.msra.mxu0 0.0
        %1105 = vmatprep.subr.mxu0 0.0
        %1106 = vmatpush1.msra.mxu0 0.0
        %1107 = vmatprep.subr.mxu0 0.0
        %1108 = vmatpush1.msra.mxu0 0.0
        %1109 = vmatprep.subr.mxu0 0.0
        %1110 = vmatpush1.msra.mxu0 0.0
        %1111 = vmatprep.subr.mxu0 0.0
        %1112 = vmatpush1.msra.mxu0 0.0
        %1113 = vmatprep.subr.mxu0 0.0
        %1114 = vmatpush1.msra.mxu0 0.0
        %1115 = vmatprep.subr.mxu0 0.0
        %1116 = vmatpush1.msra.mxu0 0.0
        %1117 = vmatprep.subr.mxu0 0.0
        %1118 = vmatpush1.msra.mxu0 0.0
        %1119 = vmatprep.subr.mxu0 0.0
        %1120 = vmatpush1.msra.mxu0 0.0
        %1121 = vmatprep.mubr.f32.mxu0 0.0
        %1122 = vmatmul.mubr.f32.gmra.mrb[0].mxu0 %v1037
        %v1123 = vpop.f32.mrb[0].mxu0
        %v1124 = vadd.f32 0.0, %v1123
        %v1125 = vpop.f32.mrb[0].mxu0
        %1126 = vmatprep.mubr.f32.mxu0 0.0
        %1127 = vmatmul.mubr.f32.gmra.mrb[0].mxu0 %v1039
        %v1128 = vpop.f32.mrb[0].mxu0
        %v1129 = vadd.f32 0.0, %v1128
        %v1130 = vpop.f32.mrb[0].mxu0
        %1131 = vmatprep.mubr.f32.mxu0 0.0
        %1132 = vmatmul.mubr.f32.gmra.mrb[0].mxu0 %v1041
        %v1133 = vpop.f32.mrb[0].mxu0
        %v1134 = vadd.f32 0.0, %v1133
        %v1135 = vpop.f32.mrb[0].mxu0
        %1136 = vmatprep.mubr.f32.mxu0 0.0
        %1137 = vmatmul.mubr.f32.gmra.mrb[0].mxu0 %v1043
        %v1138 = vpop.f32.mrb[0].mxu0
        %v1139 = vadd.f32 0.0, %v1138
        %v1140 = vpop.f32.mrb[0].mxu0
        %1141 = vmatprep.mubr.f32.mxu0 0.0
        %1142 = vmatmul.mubr.f32.gmra.mrb[0].mxu0 %v1045
        %v1143 = vpop.f32.mrb[0].mxu0
        %v1144 = vadd.f32 0.0, %v1143
        %v1145 = vpop.f32.mrb[0].mxu0
        %1146 = vmatprep.mubr.f32.mxu0 0.0
        %1147 = vmatmul.mubr.f32.gmra.mrb[0].mxu0 %v1047
        %v1148 = vpop.f32.mrb[0].mxu0
        %v1149 = vadd.f32 0.0, %v1148
        %v1150 = vpop.f32.mrb[0].mxu0
        %1151 = vmatprep.mubr.f32.mxu0 0.0
        %1152 = vmatmul.mubr.f32.gmra.mrb[0].mxu0 %v1049
        %v1153 = vpop.f32.mrb[0].mxu0
        %v1154 = vadd.f32 0.0, %v1153
        %v1155 = vpop.f32.mrb[0].mxu0
        %1156 = vmatprep.mubr.f32.mxu0 0.0
        %1157 = vmatmul.mubr.f32.gmra.mrb[0].mxu0 %v1051
        %v1158 = vpop.f32.mrb[0].mxu0
        %v1159 = vadd.f32 0.0, %v1158
        %v1160 = vpop.f32.mrb[0].mxu0
        %1161 = vmatprep.mubr.f32.mxu0 0.0
        %1162 = vmatmul.mubr.f32.gmra.mrb[0].mxu0 %v1053
        %v1163 = vpop.f32.mrb[0].mxu0
        %v1164 = vadd.f32 0.0, %v1163
        %v1165 = vpop.f32.mrb[0].mxu0
        %1166 = vmatprep.mubr.f32.mxu0 0.0
        %1167 = vmatmul.mubr.f32.gmra.mrb[0].mxu0 %v1055
        %v1168 = vpop.f32.mrb[0].mxu0
        %v1169 = vadd.f32 0.0, %v1168
        %v1170 = vpop.f32.mrb[0].mxu0
        %1171 = vdwg.mxu0
        %v1172 = vmul.f32 %v1124, %v1134
        %v1173 = vmul.f32 %v1129, %v1139
        %v1174 = vmul.f32 %v1172, 0.0001079797
        %v1175 = vmul.f32 %v1173, 0.0001079797
        %v1176 = vsub.f32 %v1164, %v1174
        %v1177 = vsub.f32 %v1169, %v1175
        %v1178 = vmul.f32 %v1124, %v1124
        %v1179 = vmul.f32 %v1129, %v1129
        %v1180 = vmul.f32 %v1178, 0.0001079797
        %v1181 = vmul.f32 %v1179, 0.0001079797
        %v1182 = vsub.f32 %v1144, %v1180
        %v1183 = vsub.f32 %v1149, %v1181
        %v1184 = vmul.f32 %v1134, %v1134
        %v1185 = vmul.f32 %v1139, %v1139
        %v1186 = vmul.f32 %v1184, 0.0001079797
        %v1187 = vmul.f32 %v1185, 0.0001079797
        %v1188 = vsub.f32 %v1154, %v1186
        %v1189 = vsub.f32 %v1159, %v1187
        %v1190 = vmul.f32 %v1176, %v1176
        %v1191 = vmul.f32 %v1177, %v1177
        %v1192 = vmul.f32 %v1182, %v1188
        %v1193 = vmul.f32 %v1183, %v1189
        %v1194 = vadd.f32 %v1192, 1e-05
        %v1195 = vadd.f32 %v1193, 1e-05
        %v1196 = vrcp.pop %v1194
        %v1197 = vmul.f32 %v1190, %v1196
        %v1198 = vrcp.pop %v1195
        %v1199 = vmul.f32 %v1191, %v1198
        %v1200 = vadd.f32 %v890, %v1197
        %v1201 = vadd.f32 %v891, %v1199
        %s1202 = scalar_lea.vmem %s184, 48 [#allocation2]
        %v1203 = vld [vmem:[%s1202] sm:$0xff]
        %v1204 = vld [vmem:[%s1202 + $0x8] sm:$0xff]
        %s1205 = scalar_lea.vmem %s193, 48 [#allocation4]
        %v1206 = vld [vmem:[%s1205] sm:$0xff]
        %v1207 = vld [vmem:[%s1205 + $0x8] sm:$0xff]
        %v1208 = vmul.f32 %v1203, %v1203
        %v1209 = vmul.f32 %v1204, %v1204
        %v1210 = vmul.f32 %v1206, %v1206
        %v1211 = vmul.f32 %v1207, %v1207
        %v1212 = vmul.f32 %v1203, %v1206
        %v1213 = vmul.f32 %v1204, %v1207
        %1216 = vrot.lane.b32.xlu0 %v1206, 16
        %v1217 = vpop.permute.xlu0 %1216
        %1218 = vrot.lane.b32.xlu0 %v1207, 16
        %v1219 = vpop.permute.xlu0 %1218
        %1224 = vrot.lane.b32.xlu0 %v1208, 32
        %v1225 = vpop.permute.xlu0 %1224
        %1226 = vrot.lane.b32.xlu0 %v1209, 32
        %v1227 = vpop.permute.xlu0 %1226
        %1232 = vrot.lane.b32.xlu0 %v1210, 48
        %v1233 = vpop.permute.xlu0 %1232
        %1234 = vrot.lane.b32.xlu0 %v1211, 48
        %v1235 = vpop.permute.xlu0 %1234
        %1240 = vrot.lane.b32.xlu0 %v1212, 64
        %v1241 = vpop.permute.xlu0 %1240
        %1242 = vrot.lane.b32.xlu0 %v1213, 64
        %v1243 = vpop.permute.xlu0 %1242
        %v1246 = vsel %vm306, %v1203, %v1217
        %v1247 = vsel %vm306, %v1204, %v1219
        %v1248 = vsel %vm309, %v1246, %v1225
        %v1249 = vsel %vm309, %v1247, %v1227
        %v1250 = vsel %vm312, %v1248, %v1233
        %v1251 = vsel %vm312, %v1249, %v1235
        %v1252 = vsel %vm315, %v1250, %v1241
        %v1253 = vsel %vm315, %v1251, %v1243
        %1254 = vmatprep.subr.mxu0 0.0
        %1255 = vmatpush1.msra.mxu0 %v1252
        %1256 = vmatprep.subr.mxu0 0.0
        %1257 = vmatpush1.msra.mxu0 %v1253
        %1258 = vmatprep.subr.mxu0 0.0
        %1259 = vmatpush1.msra.mxu0 0.0
        %1260 = vmatprep.subr.mxu0 0.0
        %1261 = vmatpush1.msra.mxu0 0.0
        %1262 = vmatprep.subr.mxu0 0.0
        %1263 = vmatpush1.msra.mxu0 0.0
        %1264 = vmatprep.subr.mxu0 0.0
        %1265 = vmatpush1.msra.mxu0 0.0
        %1266 = vmatprep.subr.mxu0 0.0
        %1267 = vmatpush1.msra.mxu0 0.0
        %1268 = vmatprep.subr.mxu0 0.0
        %1269 = vmatpush1.msra.mxu0 0.0
        %1270 = vmatprep.subr.mxu0 0.0
        %1271 = vmatpush1.msra.mxu0 0.0
        %1272 = vmatprep.subr.mxu0 0.0
        %1273 = vmatpush1.msra.mxu0 0.0
        %1274 = vmatprep.subr.mxu0 0.0
        %1275 = vmatpush1.msra.mxu0 0.0
        %1276 = vmatprep.subr.mxu0 0.0
        %1277 = vmatpush1.msra.mxu0 0.0
        %1278 = vmatprep.subr.mxu0 0.0
        %1279 = vmatpush1.msra.mxu0 0.0
        %1280 = vmatprep.subr.mxu0 0.0
        %1281 = vmatpush1.msra.mxu0 0.0
        %1282 = vmatprep.subr.mxu0 0.0
        %1283 = vmatpush1.msra.mxu0 0.0
        %1284 = vmatprep.subr.mxu0 0.0
        %1285 = vmatpush1.msra.mxu0 0.0
        %1286 = vmatprep.subr.mxu0 0.0
        %1287 = vmatpush1.msra.mxu0 0.0
        %1288 = vmatprep.subr.mxu0 0.0
        %1289 = vmatpush1.msra.mxu0 0.0
        %1290 = vmatprep.subr.mxu0 0.0
        %1291 = vmatpush1.msra.mxu0 0.0
        %1292 = vmatprep.subr.mxu0 0.0
        %1293 = vmatpush1.msra.mxu0 0.0
        %1294 = vmatprep.subr.mxu0 0.0
        %1295 = vmatpush1.msra.mxu0 0.0
        %1296 = vmatprep.subr.mxu0 0.0
        %1297 = vmatpush1.msra.mxu0 0.0
        %1298 = vmatprep.subr.mxu0 0.0
        %1299 = vmatpush1.msra.mxu0 0.0
        %1300 = vmatprep.subr.mxu0 0.0
        %1301 = vmatpush1.msra.mxu0 0.0
        %1302 = vmatprep.subr.mxu0 0.0
        %1303 = vmatpush1.msra.mxu0 0.0
        %1304 = vmatprep.subr.mxu0 0.0
        %1305 = vmatpush1.msra.mxu0 0.0
        %1306 = vmatprep.subr.mxu0 0.0
        %1307 = vmatpush1.msra.mxu0 0.0
        %1308 = vmatprep.subr.mxu0 0.0
        %1309 = vmatpush1.msra.mxu0 0.0
        %1310 = vmatprep.subr.mxu0 0.0
        %1311 = vmatpush1.msra.mxu0 0.0
        %1312 = vmatprep.subr.mxu0 0.0
        %1313 = vmatpush1.msra.mxu0 0.0
        %1314 = vmatprep.subr.mxu0 0.0
        %1315 = vmatpush1.msra.mxu0 0.0
        %1316 = vmatprep.subr.mxu0 0.0
        %1317 = vmatpush1.msra.mxu0 0.0
        %1318 = vmatprep.mubr.f32.mxu0 0.0
        %1319 = vmatmul.mubr.f32.gmra.mrb[0].mxu0 %v319
        %v1320 = vpop.f32.mrb[0].mxu0
        %v1321 = vadd.f32 0.0, %v1320
        %v1322 = vpop.f32.mrb[0].mxu0
        %1323 = vmatprep.mubr.f32.mxu0 0.0
        %1324 = vmatmul.mubr.f32.gmra.mrb[0].mxu0 %v322
        %v1325 = vpop.f32.mrb[0].mxu0
        %v1326 = vadd.f32 0.0, %v1325
        %v1327 = vpop.f32.mrb[0].mxu0
        %1328 = vdwg.mxu0
        %1331 = vrot.lane.b32.xlu0 %v1321, 112
        %v1332 = vpop.permute.xlu0 %1331
        %1333 = vrot.lane.b32.xlu0 %v1326, 112
        %v1334 = vpop.permute.xlu0 %1333
        %1335 = vrot.lane.b32.xlu0 %v1321, 96
        %v1336 = vpop.permute.xlu0 %1335
        %1337 = vrot.lane.b32.xlu0 %v1326, 96
        %v1338 = vpop.permute.xlu0 %1337
        %1339 = vrot.lane.b32.xlu0 %v1321, 80
        %v1340 = vpop.permute.xlu0 %1339
        %1341 = vrot.lane.b32.xlu0 %v1326, 80
        %v1342 = vpop.permute.xlu0 %1341
        %1343 = vrot.lane.b32.xlu0 %v1321, 64
        %v1344 = vpop.permute.xlu0 %1343
        %1345 = vrot.lane.b32.xlu0 %v1326, 64
        %v1346 = vpop.permute.xlu0 %1345
        %v1347 = vsel %vm306, %v1321, 0
        %v1349 = vsel %vm306, %v1326, 0
        %v1351 = vsel %vm306, %v1332, 0
        %v1353 = vsel %vm306, %v1334, 0
        %v1355 = vsel %vm306, %v1336, 0
        %v1357 = vsel %vm306, %v1338, 0
        %v1359 = vsel %vm306, %v1340, 0
        %v1361 = vsel %vm306, %v1342, 0
        %v1363 = vsel %vm306, %v1344, 0
        %v1365 = vsel %vm306, %v1346, 0
        %1367 = vmatprep.subr.mxu0 0.0
        %1368 = vmatpush1.msra.mxu0 %v262
        %1369 = vmatprep.subr.mxu0 0.0
        %1370 = vmatpush1.msra.mxu0 %v263
        %1371 = vmatprep.subr.mxu0 0.0
        %1372 = vmatpush1.msra.mxu0 0.0
        %1373 = vmatprep.subr.mxu0 0.0
        %1374 = vmatpush1.msra.mxu0 0.0
        %1375 = vmatprep.subr.mxu0 0.0
        %1376 = vmatpush1.msra.mxu0 0.0
        %1377 = vmatprep.subr.mxu0 0.0
        %1378 = vmatpush1.msra.mxu0 0.0
        %1379 = vmatprep.subr.mxu0 0.0
        %1380 = vmatpush1.msra.mxu0 0.0
        %1381 = vmatprep.subr.mxu0 0.0
        %1382 = vmatpush1.msra.mxu0 0.0
        %1383 = vmatprep.subr.mxu0 0.0
        %1384 = vmatpush1.msra.mxu0 0.0
        %1385 = vmatprep.subr.mxu0 0.0
        %1386 = vmatpush1.msra.mxu0 0.0
        %1387 = vmatprep.subr.mxu0 0.0
        %1388 = vmatpush1.msra.mxu0 0.0
        %1389 = vmatprep.subr.mxu0 0.0
        %1390 = vmatpush1.msra.mxu0 0.0
        %1391 = vmatprep.subr.mxu0 0.0
        %1392 = vmatpush1.msra.mxu0 0.0
        %1393 = vmatprep.subr.mxu0 0.0
        %1394 = vmatpush1.msra.mxu0 0.0
        %1395 = vmatprep.subr.mxu0 0.0
        %1396 = vmatpush1.msra.mxu0 0.0
        %1397 = vmatprep.subr.mxu0 0.0
        %1398 = vmatpush1.msra.mxu0 0.0
        %1399 = vmatprep.subr.mxu0 0.0
        %1400 = vmatpush1.msra.mxu0 0.0
        %1401 = vmatprep.subr.mxu0 0.0
        %1402 = vmatpush1.msra.mxu0 0.0
        %1403 = vmatprep.subr.mxu0 0.0
        %1404 = vmatpush1.msra.mxu0 0.0
        %1405 = vmatprep.subr.mxu0 0.0
        %1406 = vmatpush1.msra.mxu0 0.0
        %1407 = vmatprep.subr.mxu0 0.0
        %1408 = vmatpush1.msra.mxu0 0.0
        %1409 = vmatprep.subr.mxu0 0.0
        %1410 = vmatpush1.msra.mxu0 0.0
        %1411 = vmatprep.subr.mxu0 0.0
        %1412 = vmatpush1.msra.mxu0 0.0
        %1413 = vmatprep.subr.mxu0 0.0
        %1414 = vmatpush1.msra.mxu0 0.0
        %1415 = vmatprep.subr.mxu0 0.0
        %1416 = vmatpush1.msra.mxu0 0.0
        %1417 = vmatprep.subr.mxu0 0.0
        %1418 = vmatpush1.msra.mxu0 0.0
        %1419 = vmatprep.subr.mxu0 0.0
        %1420 = vmatpush1.msra.mxu0 0.0
        %1421 = vmatprep.subr.mxu0 0.0
        %1422 = vmatpush1.msra.mxu0 0.0
        %1423 = vmatprep.subr.mxu0 0.0
        %1424 = vmatpush1.msra.mxu0 0.0
        %1425 = vmatprep.subr.mxu0 0.0
        %1426 = vmatpush1.msra.mxu0 0.0
        %1427 = vmatprep.subr.mxu0 0.0
        %1428 = vmatpush1.msra.mxu0 0.0
        %1429 = vmatprep.subr.mxu0 0.0
        %1430 = vmatpush1.msra.mxu0 0.0
        %1431 = vmatprep.mubr.f32.mxu0 0.0
        %1432 = vmatmul.mubr.f32.gmra.mrb[0].mxu0 %v1347
        %v1433 = vpop.f32.mrb[0].mxu0
        %v1434 = vadd.f32 0.0, %v1433
        %v1435 = vpop.f32.mrb[0].mxu0
        %1436 = vmatprep.mubr.f32.mxu0 0.0
        %1437 = vmatmul.mubr.f32.gmra.mrb[0].mxu0 %v1349
        %v1438 = vpop.f32.mrb[0].mxu0
        %v1439 = vadd.f32 0.0, %v1438
        %v1440 = vpop.f32.mrb[0].mxu0
        %1441 = vmatprep.mubr.f32.mxu0 0.0
        %1442 = vmatmul.mubr.f32.gmra.mrb[0].mxu0 %v1351
        %v1443 = vpop.f32.mrb[0].mxu0
        %v1444 = vadd.f32 0.0, %v1443
        %v1445 = vpop.f32.mrb[0].mxu0
        %1446 = vmatprep.mubr.f32.mxu0 0.0
        %1447 = vmatmul.mubr.f32.gmra.mrb[0].mxu0 %v1353
        %v1448 = vpop.f32.mrb[0].mxu0
        %v1449 = vadd.f32 0.0, %v1448
        %v1450 = vpop.f32.mrb[0].mxu0
        %1451 = vmatprep.mubr.f32.mxu0 0.0
        %1452 = vmatmul.mubr.f32.gmra.mrb[0].mxu0 %v1355
        %v1453 = vpop.f32.mrb[0].mxu0
        %v1454 = vadd.f32 0.0, %v1453
        %v1455 = vpop.f32.mrb[0].mxu0
        %1456 = vmatprep.mubr.f32.mxu0 0.0
        %1457 = vmatmul.mubr.f32.gmra.mrb[0].mxu0 %v1357
        %v1458 = vpop.f32.mrb[0].mxu0
        %v1459 = vadd.f32 0.0, %v1458
        %v1460 = vpop.f32.mrb[0].mxu0
        %1461 = vmatprep.mubr.f32.mxu0 0.0
        %1462 = vmatmul.mubr.f32.gmra.mrb[0].mxu0 %v1359
        %v1463 = vpop.f32.mrb[0].mxu0
        %v1464 = vadd.f32 0.0, %v1463
        %v1465 = vpop.f32.mrb[0].mxu0
        %1466 = vmatprep.mubr.f32.mxu0 0.0
        %1467 = vmatmul.mubr.f32.gmra.mrb[0].mxu0 %v1361
        %v1468 = vpop.f32.mrb[0].mxu0
        %v1469 = vadd.f32 0.0, %v1468
        %v1470 = vpop.f32.mrb[0].mxu0
        %1471 = vmatprep.mubr.f32.mxu0 0.0
        %1472 = vmatmul.mubr.f32.gmra.mrb[0].mxu0 %v1363
        %v1473 = vpop.f32.mrb[0].mxu0
        %v1474 = vadd.f32 0.0, %v1473
        %v1475 = vpop.f32.mrb[0].mxu0
        %1476 = vmatprep.mubr.f32.mxu0 0.0
        %1477 = vmatmul.mubr.f32.gmra.mrb[0].mxu0 %v1365
        %v1478 = vpop.f32.mrb[0].mxu0
        %v1479 = vadd.f32 0.0, %v1478
        %v1480 = vpop.f32.mrb[0].mxu0
        %1481 = vdwg.mxu0
        %v1482 = vmul.f32 %v1434, %v1444
        %v1483 = vmul.f32 %v1439, %v1449
        %v1484 = vmul.f32 %v1482, 0.0001079797
        %v1485 = vmul.f32 %v1483, 0.0001079797
        %v1486 = vsub.f32 %v1474, %v1484
        %v1487 = vsub.f32 %v1479, %v1485
        %v1488 = vmul.f32 %v1434, %v1434
        %v1489 = vmul.f32 %v1439, %v1439
        %v1490 = vmul.f32 %v1488, 0.0001079797
        %v1491 = vmul.f32 %v1489, 0.0001079797
        %v1492 = vsub.f32 %v1454, %v1490
        %v1493 = vsub.f32 %v1459, %v1491
        %v1494 = vmul.f32 %v1444, %v1444
        %v1495 = vmul.f32 %v1449, %v1449
        %v1496 = vmul.f32 %v1494, 0.0001079797
        %v1497 = vmul.f32 %v1495, 0.0001079797
        %v1498 = vsub.f32 %v1464, %v1496
        %v1499 = vsub.f32 %v1469, %v1497
        %v1500 = vmul.f32 %v1486, %v1486
        %v1501 = vmul.f32 %v1487, %v1487
        %v1502 = vmul.f32 %v1492, %v1498
        %v1503 = vmul.f32 %v1493, %v1499
        %v1504 = vadd.f32 %v1502, 1e-05
        %v1505 = vadd.f32 %v1503, 1e-05
        %v1506 = vrcp.pop %v1504
        %v1507 = vmul.f32 %v1500, %v1506
        %v1508 = vrcp.pop %v1505
        %v1509 = vmul.f32 %v1501, %v1508
        %v1510 = vadd.f32 %v1200, %v1507
        %v1511 = vadd.f32 %v1201, %v1509
        %v1512 = vld [vmem:[%s227] sm:$0xff]
        %v1513 = vld [vmem:[%s227 + $0x8] sm:$0xff]
        %v1514 = vadd.f32 %v1512, %v1510
        %v1515 = vadd.f32 %v1513, %v1511
        %1516 = vst.msk [vmem:[%s227] sm:$0xff] %vm306, %v1514
        %1517 = vst.msk [vmem:[%s227 + $0x8] sm:$0xff] %vm306, %v1515
        %p1518 = scmp.lt.s32.totalorder %s23, 1
        %s1519 = scalar_select %p1518, %s23, 1
        %s1520 = smul.addr %s1519, 2
        %s1521 = smul.addr %s1520, 8
        %s1522 = scalar_lea.vmem %s2, %s1521
        // Predicated region
        $region41: #{ncc_loss.1} parent=27 // pred_check
          %p1523 = pneg %p105
        $region42: #{ncc_loss.1} parent=27 // pred_check_branch
          %1525 = sbr.rel (%p1523) target = $region44
        $region43: #{ncc_loss.1} parent=27 // pred_region
          _
        $region44: #{ncc_loss.1} parent=27 // pred_fallthru
          _
      $region28: #{ncc_loss.1} parent=5 // pred_fallthru
        _
      %p1526 = scmp.le.s32.totalorder 2, %s14
      // Predicated region
      $region45: #{ncc_loss.1} parent=5 // pred_check
        %p1527 = pneg %p1526
      $region46: #{ncc_loss.1} parent=5 // pred_check_branch
        %1529 = sbr.rel (%p1527) target = $region48
      $region47: #{ncc_loss.1} parent=5 // pred_region
        %s1530 = ssub.s32 %s14, 2
        // Predicated region
        $region49: #{ncc_loss.1} parent=47 // pred_check
          %p1531 = pneg %p111
        $region50: #{ncc_loss.1} parent=47 // pred_check_branch
          %1533 = sbr.rel (%p1531) target = $region52
        $region51: #{ncc_loss.1} parent=47 // pred_region
          %p1534 = scmp.lt.s32.totalorder %s25, 1
          %s1535 = scalar_select %p1534, %s25, 1
          %s1536 = smul.addr %s1535, 2
          %s1537 = smul.addr %s1536, 8
          %s1538 = scalar_lea.vmem %s2, %s1537
        $region52: #{ncc_loss.1} parent=47 // pred_fallthru
          _
      $region48: #{ncc_loss.1} parent=5 // pred_fallthru
        _
    $region6: #{ncc_loss.1} parent=1 // loop_footer
      %s18 = sadd.s32 1, %s14
    $region7: #{ncc_loss.1} parent=1 // loop_footer_branch
      %13 = sbr.rel target = $region3
    $region8: #{ncc_loss.1} parent=1 // loop_exit
      _
    %1539 = vsyncpa [#allocation3], 1
    %s1540 = scalar_lea.sflag [#allocation3], 1
    %1541 = vsyncpa %s1540, 1
    %1542 = vsyncpa [#allocation5], 1
    %s1543 = scalar_lea.sflag [#allocation5], 1
    %1544 = vsyncpa %s1543, 1

</llo_original>
